<compile_context>
chip_gen: v7x
topology: tpu7x:2x2x1
jax: 0.10.0
libtpu: 0.0.40
codegen_flags: <defaults>
</compile_context>

<pallas_src>
import functools
import math

import numpy as np

import jax
import jax.numpy as jnp
from jax import lax
from jax.experimental import pallas as pl
from jax.experimental.pallas import tpu as pltpu


# CompilerParams was called TPUCompilerParams in older JAX releases.
_CompilerParams = getattr(pltpu, "CompilerParams", None)
if _CompilerParams is None:  # pragma: no cover - older jax
    _CompilerParams = pltpu.TPUCompilerParams

_LANE = 128
_VMEM_LIMIT = 32 * 1024 * 1024        # scoped VMEM cap requested from Mosaic
_VMEM_BUDGET = 20 * 1024 * 1024       # tile-sizing budget (headroom under the cap)


def _round_up(v, m):
    return -(-v // m) * m


# --------------------------------------------------------------------------------------
# One-time probe of pltpu.roll's sublane-rotation sign convention (cached per backend).
# Guarantees the temporal-shift direction is correct regardless of convention, and
# falls back to a slice/concat shift if the sublane roll does not lower.
# --------------------------------------------------------------------------------------
@functools.lru_cache(maxsize=None)
def _roll_convention_for(backend_key):
    del backend_key  # only used as the cache key
    try:
        def probe(x_ref, o_ref):
            o_ref[...] = pltpu.roll(x_ref[...], 1, axis=0)

        x = jnp.arange(8 * 128, dtype=jnp.float32).reshape(8, 128)
        y = pl.pallas_call(
            probe, out_shape=jax.ShapeDtypeStruct((8, 128), jnp.float32))(x)
        y = jax.block_until_ready(y)
        if bool(jnp.array_equal(y, jnp.roll(x, 1, axis=0))):
            return 1      # matches jnp.roll
        if bool(jnp.array_equal(y, jnp.roll(x, -1, axis=0))):
            return -1     # opposite sign
        return 0
    except Exception:      # noqa: BLE001 - any lowering/runtime issue -> safe fallback
        return 0


def _roll_convention():
    try:
        dev = jax.devices()[0]
        key = (jax.default_backend(), getattr(dev, "device_kind", ""))
    except Exception:      # noqa: BLE001
        key = ("unknown", "")
    return _roll_convention_for(key)


# --------------------------------------------------------------------------------------
# Kernels
# --------------------------------------------------------------------------------------
def _partial_moments(v):
    """Per-tile (2, C) block: [sum over rows ; sum of squares over rows], f32."""
    return jnp.concatenate(
        [jnp.sum(v, axis=0, keepdims=True), jnp.sum(v * v, axis=0, keepdims=True)],
        axis=0)


def _conv1_stats_kernel(x_ref, w1_ref, stats_ref):
    """Pass 1: conv1 ("perm") recomputed in VMEM, only BN1 partial stats written to HBM.
    Padded x rows/channels are zero and contribute nothing, so no row mask is needed."""
    h = jnp.dot(x_ref[...], w1_ref[...], preferred_element_type=jnp.float32)
    stats_ref[...] = _partial_moments(h)[None]


def _fused_gts_kernel(x_ref, w1_ref, w2_ref, scale1_ref, bias1_ref, y_ref, stats_ref, *,
                      tile_rows, rows_true, seq_len, n_groups, c1_true, roll_mode,
                      mm_dtype, mask_rows):
    """Pass 2: conv1 + BN1 + ReLU + temporal shift + conv2 + BN2 partial statistics."""
    h = jnp.dot(x_ref[...], w1_ref[...], preferred_element_type=jnp.float32)
    h = jnp.maximum(h * scale1_ref[...] + bias1_ref[...], 0.0)
    if mask_rows:
        # bias1 + ReLU make padded rows nonzero; zero them so BN2 stats stay exact.
        # Padded rows form whole fake (batch, T) segments (tile_rows % T == 0), so this
        # never leaks into the temporal shift of real rows.
        row = (lax.broadcasted_iota(jnp.int32, (tile_rows, 1), 0)
               + pl.program_id(0) * tile_rows)
        h = jnp.where(row < rows_true, h, 0.0)

    r, c = h.shape
    slide = c1_true // n_groups
    # Lane-only / row-only masks (no full-slab int32 iotas).
    c_idx = lax.broadcasted_iota(jnp.int32, (1, c), 1)
    is_left = (c_idx % slide) == 0          # channels g*slide     -> shift left in time
    is_right = (c_idx % slide) == 1         # channels g*slide + 1 -> shift right in time
    t_idx = lax.broadcasted_iota(jnp.int32, (r, 1), 0) % seq_len   # tile_rows % T == 0
    not_last = t_idx != (seq_len - 1)
    not_first = t_idx != 0

    if roll_mode == 0:
        # Emergency fallback: assemble shifted rows with static slices.
        zero_row = jnp.zeros((1, c), h.dtype)
        h_next = jnp.concatenate([h[1:, :], zero_row], axis=0)    # row t <- row t+1
        h_prev = jnp.concatenate([zero_row, h[:-1, :]], axis=0)   # row t <- row t-1
    else:
        # XLU sublane rotation; circular wrap-around rows are masked just below.
        s_next, s_prev = (r - 1, 1) if roll_mode == 1 else (1, r - 1)
        h_next = pltpu.roll(h, s_next, axis=0)                    # row t <- row t+1
        h_prev = pltpu.roll(h, s_prev, axis=0)                    # row t <- row t-1

    left_val = jnp.where(not_last, h_next, 0.0)
    right_val = jnp.where(not_first, h_prev, 0.0)
    h = jnp.where(is_left, left_val, jnp.where(is_right, right_val, h))

    y = jnp.dot(h.astype(mm_dtype), w2_ref[...], preferred_element_type=jnp.float32)
    y_ref[...] = y.astype(y_ref.dtype)
    stats_ref[...] = _partial_moments(y)[None]


def _bn2_apply_kernel(y_ref, scale2_ref, bias2_ref, o_ref):
    """Pass 3: BN2 apply (channel_shuffle already folded into the parameters)."""
    y = y_ref[...].astype(jnp.float32)
    o_ref[...] = (y * scale2_ref[...] + bias2_ref[...]).astype(o_ref.dtype)


# --------------------------------------------------------------------------------------
# Wrapper helpers
# --------------------------------------------------------------------------------------
def _pad_channels(c):
    """Pad a channel count to a lane-dense multiple of 128 when cheap (tiny widths or
    <= 12.5% byte inflation); otherwise keep the true width.  Correct either way since
    every block covers the full channel dim."""
    cp = _round_up(c, _LANE)
    return cp if (c <= 32 or (cp - c) * 8 <= c) else c


def _choose_tile_rows(rows, seq_len, target_rows, bytes_per_row, vmem_budget):
    base = seq_len * 8 // math.gcd(seq_len, 8)   # multiple of T (shift in-tile) and of 8
    cap = max(1, min(target_rows, vmem_budget // max(bytes_per_row, 1)))
    tile = max(base, (cap // base) * base)
    if rows > base:
        # Keep >= 2 grid steps so v7x's two TensorCores both get work from the
        # "parallel" grid axis.
        half = _round_up(-(-rows // 2), base)
        tile = min(tile, half)
    return tile


def _stats_to_scale_bias(stats, gamma, beta, count, eps):
    # TODO(synk): for very large N*T consider a shifted/Welford reduction here.
    tot = jnp.sum(stats, axis=0)                                 # (2, C)
    mean = tot[0] / count
    var = jnp.maximum(tot[1] / count - mean * mean, 0.0)         # biased batch variance
    scale = gamma.reshape(-1) * lax.rsqrt(var + eps)
    bias = beta.reshape(-1) - mean * scale
    c = gamma.shape[-1]
    return (scale.reshape(1, c).astype(jnp.float32),
            bias.reshape(1, c).astype(jnp.float32))


# --------------------------------------------------------------------------------------
# Forward
# --------------------------------------------------------------------------------------
@functools.partial(
    jax.jit,
    static_argnames=("n_groups", "eps", "matmul_dtype", "out_dtype",
                     "target_tile_rows", "roll_mode"))
def _gts_conv_unit_impl(x, kernel_params, *, n_groups, eps, matmul_dtype, out_dtype,
                        target_tile_rows, roll_mode):
    w1t, g1, b1, w2t, g2, b2 = kernel_params
    N, Cin, T = x.shape
    C1 = w1t.shape[1]
    rows = N * T

    Cinp = _pad_channels(Cin)
    C1p = _pad_channels(C1)
    mmb = np.dtype(matmul_dtype).itemsize
    # pass-2 per-row VMEM footprint: double-buffered x / y blocks + ~5 f32 temporaries.
    bytes_per_row = 2 * Cinp * mmb + 2 * C1p * mmb + 20 * C1p + 4 * Cinp
    w_bytes = 2 * (Cinp * C1p + C1p * C1p) * mmb
    budget = max(_VMEM_BUDGET - w_bytes, 2 * 1024 * 1024)

    tile_rows = _choose_tile_rows(rows, T, target_tile_rows, bytes_per_row, budget)
    num_tiles = -(-rows // tile_rows)
    rows_pad = num_tiles * tile_rows
    mask_rows = rows_pad != rows

    # glue: NCT -> (rows, Cin) channels-last slab (time fastest); pad rows + channels and
    # cast to the matmul dtype (XLA fuses pad + cast into the transpose copy).
    x2d = jnp.transpose(x, (0, 2, 1)).reshape(rows, Cin)
    x2d = jnp.pad(x2d, ((0, rows_pad - rows), (0, Cinp - Cin))).astype(matmul_dtype)

    w1m = jnp.pad(w1t, ((0, Cinp - Cin), (0, C1p - C1))).astype(matmul_dtype)
    w2m = jnp.pad(w2t, ((0, C1p - C1), (0, C1p - C1))).astype(matmul_dtype)

    def pad_vec(v):
        return jnp.pad(v.reshape(-1), (0, C1p - C1)).reshape(1, C1p).astype(jnp.float32)

    g1p, b1p, g2p, b2p = pad_vec(g1), pad_vec(b1), pad_vec(g2), pad_vec(b2)

    cparams = _CompilerParams(dimension_semantics=("parallel",),
                              vmem_limit_bytes=_VMEM_LIMIT)

    def row_spec(c):
        return pl.BlockSpec((tile_rows, c), lambda i: (i, 0))

    def resident_spec(arr):   # constant index_map -> fetched into VMEM once, stays there
        return pl.BlockSpec(arr.shape, lambda i: (0,) * arr.ndim)

    stats_spec = pl.BlockSpec((1, 2, C1p), lambda i: (i, 0, 0))
    stats_shape = jax.ShapeDtypeStruct((num_tiles, 2, C1p), jnp.float32)

    # -------- pass 1: BN1 statistics only (conv1 recomputed in VMEM, no h written) -----
    st1 = pl.pallas_call(
        _conv1_stats_kernel,
        grid=(num_tiles,),
        in_specs=[row_spec(Cinp), resident_spec(w1m)],
        out_specs=stats_spec,
        out_shape=stats_shape,
        compiler_params=cparams,
    )(x2d, w1m)
    scale1, bias1 = _stats_to_scale_bias(st1, g1p, b1p, rows, eps)

    # -------- pass 2: conv1 + BN1 + ReLU + shift + conv2 + BN2 partial statistics ------
    y, st2 = pl.pallas_call(
        functools.partial(
            _fused_gts_kernel, tile_rows=tile_rows, rows_true=rows, seq_len=T,
            n_groups=n_groups, c1_true=C1, roll_mode=roll_mode,
            mm_dtype=matmul_dtype, mask_rows=mask_rows),
        grid=(num_tiles,),
        in_specs=[row_spec(Cinp), resident_spec(w1m), resident_spec(w2m),
                  resident_spec(scale1), resident_spec(bias1)],
        out_specs=[row_spec(C1p), stats_spec],
        out_shape=[jax.ShapeDtypeStruct((rows_pad, C1p), matmul_dtype), stats_shape],
        compiler_params=cparams,
    )(x2d, w1m, w2m, scale1, bias1)
    scale2, bias2 = _stats_to_scale_bias(st2, g2p, b2p, rows, eps)

    # -------- pass 3: BN2 apply ---------------------------------------------------------
    out2d = pl.pallas_call(
        _bn2_apply_kernel,
        grid=(num_tiles,),
        in_specs=[row_spec(C1p), resident_spec(scale2), resident_spec(bias2)],
        out_specs=row_spec(C1p),
        out_shape=jax.ShapeDtypeStruct((rows_pad, C1p), out_dtype),
        compiler_params=cparams,
    )(y, scale2, bias2)

    out2d = out2d[:rows, :C1]
    return jnp.transpose(out2d.reshape(N, T, C1), (0, 2, 1))


def gts_conv_unit(x, kernel_params, *, n_groups, eps=1e-5, matmul_dtype=jnp.bfloat16,
                  out_dtype=jnp.float32, target_tile_rows=1024):
    """x: (N, C_in, T) float32 (torch Conv1d NCT layout). Returns (N, n_fs, T) out_dtype.

    Set out_dtype=jnp.bfloat16 if the downstream consumer accepts it (halves the
    largest HBM write of this bandwidth-bound pipeline)."""
    roll_mode = _roll_convention()   # probed eagerly, outside any trace
    return _gts_conv_unit_impl(x, tuple(kernel_params), n_groups=int(n_groups),
                               eps=float(eps), matmul_dtype=matmul_dtype,
                               out_dtype=out_dtype,
                               target_tile_rows=int(target_tile_rows),
                               roll_mode=roll_mode)


# ----------------------------- parameter construction (deterministic) ------------------
def init_params(key, i_nc, n_fs, n_groups, first_grouped_conv=True):
    g1 = n_groups if first_grouped_conv else 1
    k1, k2, k3, k4, k5, k6 = jax.random.split(key, 6)

    # perm conv: Conv1d(i_nc, n_fs, k=1, groups=g1, bias=False) -> block-diag (n_fs, i_nc)
    in_pg1, out_pg1 = i_nc // g1, n_fs // g1
    w1 = 0.5 * jax.random.normal(k1, (n_fs, in_pg1), jnp.float32)
    w1_full = jnp.zeros((n_fs, i_nc), jnp.float32)
    for o in range(n_fs):
        grp = o // out_pg1
        w1_full = w1_full.at[o, grp * in_pg1:(grp + 1) * in_pg1].set(w1[o])
    gamma1 = 1.0 + 0.1 * jax.random.normal(k2, (n_fs,), jnp.float32)
    beta1 = 0.1 * jax.random.normal(k3, (n_fs,), jnp.float32)

    # GTSConv conv: Conv1d(n_fs, n_fs, k=1, groups=n_groups, bias=False)
    cpg = n_fs // n_groups
    w2 = 0.5 * jax.random.normal(k4, (n_fs, cpg), jnp.float32)
    w2_full = jnp.zeros((n_fs, n_fs), jnp.float32)
    for o in range(n_fs):
        grp = o // cpg
        w2_full = w2_full.at[o, grp * cpg:(grp + 1) * cpg].set(w2[o])
    gamma2 = 1.0 + 0.1 * jax.random.normal(k5, (n_fs,), jnp.float32)
    beta2 = 0.1 * jax.random.normal(k6, (n_fs,), jnp.float32)

    return dict(w1_full=w1_full, gamma1=gamma1, beta1=beta1,
                w2_full=w2_full, gamma2=gamma2, beta2=beta2)


def prepare_kernel_params(p, n_fs, n_groups):
    """Fold channel_shuffle into a static permutation of conv2 / BN2 params; pre-transpose."""
    cpg = n_fs // n_groups
    # channel_shuffle: out[:, k, :] = y[:, src[k], :],  src[k] = (k % groups)*cpg + k//groups
    src = jnp.array([(k % n_groups) * cpg + k // n_groups for k in range(n_fs)], jnp.int32)
    w1t = p['w1_full'].T                                   # (i_nc, n_fs)
    w2t = p['w2_full'][src].T                              # (n_fs, n_fs)
    g1 = p['gamma1'].reshape(1, n_fs)
    b1 = p['beta1'].reshape(1, n_fs)
    g2 = p['gamma2'][src].reshape(1, n_fs)
    b2 = p['beta2'][src].reshape(1, n_fs)
    return (w1t, g1, b1, w2t, g2, b2)


# ----------------------------- pure-JAX reference (faithful to the torch forward) ------
def reference(x, p, n_groups, eps=1e-5):
    hp = lax.Precision.HIGHEST
    N, Cin, T = x.shape
    n_fs = p['w1_full'].shape[0]
    h = jnp.einsum('oc,nct->not', p['w1_full'], x, precision=hp)
    m = h.mean(axis=(0, 2), keepdims=True)
    v = ((h - m) ** 2).mean(axis=(0, 2), keepdims=True)
    h = (h - m) / jnp.sqrt(v + eps) * p['gamma1'][None, :, None] + p['beta1'][None, :, None]
    h = jnp.maximum(h, 0.0)
    slide = n_fs // n_groups
    left_idx = jnp.array([i * slide for i in range(n_groups)])
    right_idx = jnp.array([i * slide + 1 for i in range(n_groups)])
    z = jnp.zeros((N, n_groups, 1), h.dtype)
    left_vals = jnp.concatenate([h[:, left_idx, 1:], z], axis=2)
    right_vals = jnp.concatenate([z, h[:, right_idx, :-1]], axis=2)
    h = h.at[:, left_idx].set(left_vals)
    h = h.at[:, right_idx].set(right_vals)
    y = jnp.einsum('oc,nct->not', p['w2_full'], h, precision=hp)
    m2 = y.mean(axis=(0, 2), keepdims=True)
    v2 = ((y - m2) ** 2).mean(axis=(0, 2), keepdims=True)
    y = (y - m2) / jnp.sqrt(v2 + eps) * p['gamma2'][None, :, None] + p['beta2'][None, :, None]
    cpg = n_fs // n_groups
    y = y.reshape(N, n_groups, cpg, T).transpose(0, 2, 1, 3).reshape(N, n_fs, T)
    return y


if __name__ == "__main__":
    N, i_nc, n_fs, n_groups, T = 2, 8, 16, 4, 16
    key = jax.random.PRNGKey(0)
    kx, kp = jax.random.split(key)
    x = jax.random.normal(kx, (N, i_nc, T), jnp.float32)
    params = init_params(kp, i_nc, n_fs, n_groups, first_grouped_conv=True)
    kernel_params = prepare_kernel_params(params, n_fs, n_groups)
    ref = reference(x, params, n_groups)

    # f32 MXU operands, default tile sizing (2 grid steps, no row padding): check vs ref.
    out = gts_conv_unit(x, kernel_params, n_groups=n_groups, matmul_dtype=jnp.float32)
    out = jax.block_until_ready(out)
    assert out.shape == (N, n_fs, T), out.shape
    err = float(jnp.max(jnp.abs(out - ref)))
    assert jnp.allclose(out, ref, atol=5e-3, rtol=5e-3), err

    # Uneven rows (rows_pad > rows): exercises the pass-2 row mask + padded statistics.
    N2 = 3
    x2 = jax.random.normal(jax.random.PRNGKey(1), (N2, i_nc, T), jnp.float32)
    out2 = gts_conv_unit(x2, kernel_params, n_groups=n_groups, matmul_dtype=jnp.float32,
                         target_tile_rows=2 * T)
    out2 = jax.block_until_ready(out2)
    ref2 = reference(x2, params, n_groups)
    err2 = float(jnp.max(jnp.abs(out2 - ref2)))
    assert jnp.allclose(out2, ref2, atol=5e-3, rtol=5e-3), err2

    # Default bf16 MXU operands (f32 accumulation / f32 BN statistics): sanity check.
    out_bf16 = gts_conv_unit(x, kernel_params, n_groups=n_groups)
    out_bf16 = jax.block_until_ready(out_bf16)
    assert bool(jnp.all(jnp.isfinite(out_bf16)))
    assert float(jnp.max(jnp.abs(out_bf16 - out))) < 0.3

    print("KERNEL_OK")
</pallas_src>

<mosaic_0001>
module attributes {stable_mosaic.version = 11 : i64} {
  func.func @probe(%arg0: memref<8x128xf32, #tpu.memory_space<vmem>>, %arg1: memref<8x128xf32, #tpu.memory_space<vmem>>) attributes {dimension_semantics = [], scalar_prefetch = 0 : i64, scratch_operands = 0 : i64, tpu.core_type = #tpu.core_type<tc>} {
    %c0 = arith.constant 0 : index
    %c0_0 = arith.constant 0 : index
    %0 = vector.load %arg0[%c0, %c0_0] : memref<8x128xf32, #tpu.memory_space<vmem>>, vector<8x128xf32>
    %c1_i32 = arith.constant 1 : i32
    %1 = tpu.dynamic_rotate %0 by %c1_i32 dim 0 : vector<8x128xf32>, i32 -> vector<8x128xf32>
    %c0_1 = arith.constant 0 : index
    %c0_2 = arith.constant 0 : index
    %2 = vector.load %arg1[%c0_1, %c0_2] : memref<8x128xf32, #tpu.memory_space<vmem>>, vector<8x128xf32>
    tpu.vector_store %arg1[%c0_1, %c0_2], %1 {strides = array<i32>} : memref<8x128xf32, #tpu.memory_space<vmem>>, vector<8x128xf32>,
    return
  }
}

module attributes {stable_mosaic.version = 11 : i64} {
  func.func @_conv1_stats_kernel(%arg0: i32, %arg1: memref<16x128xf32, #tpu.memory_space<vmem>>, %arg2: memref<128x128xf32, #tpu.memory_space<vmem>>, %arg3: memref<1x2x128xf32, #tpu.memory_space<vmem>>) attributes {dimension_semantics = [#tpu.dimension_semantics<parallel>], iteration_bounds = array<i64: 2>, scalar_prefetch = 0 : i64, scratch_operands = 0 : i64, tpu.core_type = #tpu.core_type<tc>, window_params = [{transform_indices = @transform_0, window_bounds = array<i64: 16, 128>}, {pipeline_mode = #tpu.pipeline_mode<synchronous>, transform_indices = @transform_1, window_bounds = array<i64: 128, 128>}, {transform_indices = @transform_2, window_bounds = array<i64: 1, 2, 128>}]} {
    %c0 = arith.constant 0 : index
    %c0_0 = arith.constant 0 : index
    %0 = vector.load %arg1[%c0, %c0_0] : memref<16x128xf32, #tpu.memory_space<vmem>>, vector<16x128xf32>
    %c0_1 = arith.constant 0 : index
    %c0_2 = arith.constant 0 : index
    %1 = vector.load %arg2[%c0_1, %c0_2] : memref<128x128xf32, #tpu.memory_space<vmem>>, vector<128x128xf32>
    %cst = arith.constant dense<0.000000e+00> : vector<16x128xf32>
    %2 = tpu.matmul %0, %1, %cst {dimension_numbers = #tpu.dot_dimension_numbers<[1], [0], [0], [1], [0, 0, 1, 1], [], []>} : vector<16x128xf32>, vector<128x128xf32>, vector<16x128xf32> -> vector<16x128xf32>
    %cst_3 = arith.constant dense<0.000000e+00> : vector<128xf32>
    %3 = vector.multi_reduction <add>, %2, %cst_3 [0] : vector<16x128xf32> to vector<128xf32>
    %4 = vector.shape_cast %3 : vector<128xf32> to vector<1x128xf32>
    %5 = arith.mulf %2, %2 : vector<16x128xf32>
    %cst_4 = arith.constant dense<0.000000e+00> : vector<128xf32>
    %6 = vector.multi_reduction <add>, %5, %cst_4 [0] : vector<16x128xf32> to vector<128xf32>
    %7 = vector.shape_cast %6 : vector<128xf32> to vector<1x128xf32>
    %8 = tpu.concatenate %4, %7 in 0 : vector<1x128xf32>, vector<1x128xf32> -> vector<2x128xf32>
    %9 = vector.shape_cast %8 : vector<2x128xf32> to vector<1x2x128xf32>
    %c0_5 = arith.constant 0 : index
    %c0_6 = arith.constant 0 : index
    %c0_7 = arith.constant 0 : index
    %10 = vector.load %arg3[%c0_5, %c0_6, %c0_7] : memref<1x2x128xf32, #tpu.memory_space<vmem>>, vector<1x2x128xf32>
    tpu.vector_store %arg3[%c0_5, %c0_6, %c0_7], %9 {strides = array<i32>} : memref<1x2x128xf32, #tpu.memory_space<vmem>>, vector<1x2x128xf32>,
    return
  }
  func.func @transform_0(%arg0: i32) -> (i32, i32) {
    %c0_i32 = arith.constant 0 : i32
    %c0_i32_0 = arith.constant 0 : i32
    return %arg0, %c0_i32 : i32, i32
  }
  func.func @transform_1(%arg0: i32) -> (i32, i32) {
    %c0_i32 = arith.constant 0 : i32
    %c0_i32_0 = arith.constant 0 : i32
    %c0_i32_1 = arith.constant 0 : i32
    return %c0_i32, %c0_i32_0 : i32, i32
  }
  func.func @transform_2(%arg0: i32) -> (i32, i32, i32) {
    %c0_i32 = arith.constant 0 : i32
    %c0_i32_0 = arith.constant 0 : i32
    %c0_i32_1 = arith.constant 0 : i32
    return %arg0, %c0_i32, %c0_i32_0 : i32, i32, i32
  }
}

module attributes {stable_mosaic.version = 11 : i64} {
  func.func @_fused_gts_kernel(%arg0: i32, %arg1: memref<16x128xf32, #tpu.memory_space<vmem>>, %arg2: memref<128x128xf32, #tpu.memory_space<vmem>>, %arg3: memref<128x128xf32, #tpu.memory_space<vmem>>, %arg4: memref<1x128xf32, #tpu.memory_space<vmem>>, %arg5: memref<1x128xf32, #tpu.memory_space<vmem>>, %arg6: memref<16x128xf32, #tpu.memory_space<vmem>>, %arg7: memref<1x2x128xf32, #tpu.memory_space<vmem>>) attributes {dimension_semantics = [#tpu.dimension_semantics<parallel>], iteration_bounds = array<i64: 2>, scalar_prefetch = 0 : i64, scratch_operands = 0 : i64, tpu.core_type = #tpu.core_type<tc>, window_params = [{transform_indices = @transform_0, window_bounds = array<i64: 16, 128>}, {pipeline_mode = #tpu.pipeline_mode<synchronous>, transform_indices = @transform_1, window_bounds = array<i64: 128, 128>}, {pipeline_mode = #tpu.pipeline_mode<synchronous>, transform_indices = @transform_2, window_bounds = array<i64: 128, 128>}, {pipeline_mode = #tpu.pipeline_mode<synchronous>, transform_indices = @transform_3, window_bounds = array<i64: 1, 128>}, {pipeline_mode = #tpu.pipeline_mode<synchronous>, transform_indices = @transform_4, window_bounds = array<i64: 1, 128>}, {transform_indices = @transform_5, window_bounds = array<i64: 16, 128>}, {transform_indices = @transform_6, window_bounds = array<i64: 1, 2, 128>}]} {
    %c0 = arith.constant 0 : index
    %c0_0 = arith.constant 0 : index
    %0 = vector.load %arg1[%c0, %c0_0] : memref<16x128xf32, #tpu.memory_space<vmem>>, vector<16x128xf32>
    %c0_1 = arith.constant 0 : index
    %c0_2 = arith.constant 0 : index
    %1 = vector.load %arg2[%c0_1, %c0_2] : memref<128x128xf32, #tpu.memory_space<vmem>>, vector<128x128xf32>
    %cst = arith.constant dense<0.000000e+00> : vector<16x128xf32>
    %2 = tpu.matmul %0, %1, %cst {dimension_numbers = #tpu.dot_dimension_numbers<[1], [0], [0], [1], [0, 0, 1, 1], [], []>} : vector<16x128xf32>, vector<128x128xf32>, vector<16x128xf32> -> vector<16x128xf32>
    %c0_3 = arith.constant 0 : index
    %c0_4 = arith.constant 0 : index
    %3 = vector.load %arg4[%c0_3, %c0_4] : memref<1x128xf32, #tpu.memory_space<vmem>>, vector<1x128xf32>
    %4 = vector.broadcast %3 : vector<1x128xf32> to vector<16x128xf32>
    %5 = arith.mulf %2, %4 : vector<16x128xf32>
    %c0_5 = arith.constant 0 : index
    %c0_6 = arith.constant 0 : index
    %6 = vector.load %arg5[%c0_5, %c0_6] : memref<1x128xf32, #tpu.memory_space<vmem>>, vector<1x128xf32>
    %7 = vector.broadcast %6 : vector<1x128xf32> to vector<16x128xf32>
    %8 = arith.addf %5, %7 : vector<16x128xf32>
    %cst_7 = arith.constant 0.000000e+00 : f32
    %9 = vector.broadcast %cst_7 : f32 to vector<16x128xf32>
    %10 = arith.maximumf %8, %9 : vector<16x128xf32>
    %11 = tpu.iota {dimensions = array<i32: 1>} : vector<1x128xi32>
    %c4_i32 = arith.constant 4 : i32
    %c0_i32 = arith.constant 0 : i32
    %12 = arith.cmpi eq, %c4_i32, %c0_i32 : i32
    %c1_i32 = arith.constant 1 : i32
    %13 = arith.select %12, %c1_i32, %c4_i32 : i32
    %14 = vector.broadcast %13 : i32 to vector<1x128xi32>
    %15 = arith.remsi %11, %14 : vector<1x128xi32>
    %c0_i32_8 = arith.constant 0 : i32
    %16 = vector.broadcast %c0_i32_8 : i32 to vector<1x128xi32>
    %17 = arith.cmpi ne, %15, %16 : vector<1x128xi32>
    %c0_i32_9 = arith.constant 0 : i32
    %18 = vector.broadcast %c0_i32_9 : i32 to vector<1x128xi32>
    %19 = arith.cmpi slt, %15, %18 : vector<1x128xi32>
    %c0_i32_10 = arith.constant 0 : i32
    %20 = arith.cmpi slt, %13, %c0_i32_10 : i32
    %21 = vector.broadcast %20 : i1 to vector<1x128xi1>
    %22 = vector.broadcast %21 : vector<1x128xi1> to vector<1x128xi1>
    %23 = arith.xori %19, %22 : vector<1x128xi1>
    %24 = arith.andi %23, %17 : vector<1x128xi1>
    %25 = vector.broadcast %13 : i32 to vector<1x128xi32>
    %26 = arith.addi %15, %25 : vector<1x128xi32>
    %27 = arith.select %24, %26, %15 : vector<1x128xi1>, vector<1x128xi32>
    %c0_i32_11 = arith.constant 0 : i32
    %28 = vector.broadcast %c0_i32_11 : i32 to vector<1x128xi32>
    %29 = arith.cmpi eq, %27, %28 : vector<1x128xi32>
    %c4_i32_12 = arith.constant 4 : i32
    %c0_i32_13 = arith.constant 0 : i32
    %30 = arith.cmpi eq, %c4_i32_12, %c0_i32_13 : i32
    %c1_i32_14 = arith.constant 1 : i32
    %31 = arith.select %30, %c1_i32_14, %c4_i32_12 : i32
    %32 = vector.broadcast %31 : i32 to vector<1x128xi32>
    %33 = arith.remsi %11, %32 : vector<1x128xi32>
    %c0_i32_15 = arith.constant 0 : i32
    %34 = vector.broadcast %c0_i32_15 : i32 to vector<1x128xi32>
    %35 = arith.cmpi ne, %33, %34 : vector<1x128xi32>
    %c0_i32_16 = arith.constant 0 : i32
    %36 = vector.broadcast %c0_i32_16 : i32 to vector<1x128xi32>
    %37 = arith.cmpi slt, %33, %36 : vector<1x128xi32>
    %c0_i32_17 = arith.constant 0 : i32
    %38 = arith.cmpi slt, %31, %c0_i32_17 : i32
    %39 = vector.broadcast %38 : i1 to vector<1x128xi1>
    %40 = vector.broadcast %39 : vector<1x128xi1> to vector<1x128xi1>
    %41 = arith.xori %37, %40 : vector<1x128xi1>
    %42 = arith.andi %41, %35 : vector<1x128xi1>
    %43 = vector.broadcast %31 : i32 to vector<1x128xi32>
    %44 = arith.addi %33, %43 : vector<1x128xi32>
    %45 = arith.select %42, %44, %33 : vector<1x128xi1>, vector<1x128xi32>
    %c1_i32_18 = arith.constant 1 : i32
    %46 = vector.broadcast %c1_i32_18 : i32 to vector<1x128xi32>
    %47 = arith.cmpi eq, %45, %46 : vector<1x128xi32>
    %48 = tpu.iota {dimensions = array<i32: 0>} : vector<16x1xi32>
    %c16_i32 = arith.constant 16 : i32
    %c0_i32_19 = arith.constant 0 : i32
    %49 = arith.cmpi eq, %c16_i32, %c0_i32_19 : i32
    %c1_i32_20 = arith.constant 1 : i32
    %50 = arith.select %49, %c1_i32_20, %c16_i32 : i32
    %51 = vector.broadcast %50 : i32 to vector<16x1xi32>
    %52 = arith.remsi %48, %51 : vector<16x1xi32>
    %c0_i32_21 = arith.constant 0 : i32
    %53 = vector.broadcast %c0_i32_21 : i32 to vector<16x1xi32>
    %54 = arith.cmpi ne, %52, %53 : vector<16x1xi32>
    %c0_i32_22 = arith.constant 0 : i32
    %55 = vector.broadcast %c0_i32_22 : i32 to vector<16x1xi32>
    %56 = arith.cmpi slt, %52, %55 : vector<16x1xi32>
    %c0_i32_23 = arith.constant 0 : i32
    %57 = arith.cmpi slt, %50, %c0_i32_23 : i32
    %58 = vector.broadcast %57 : i1 to vector<16x1xi1>
    %59 = vector.broadcast %58 : vector<16x1xi1> to vector<16x1xi1>
    %60 = arith.xori %56, %59 : vector<16x1xi1>
    %61 = arith.andi %60, %54 : vector<16x1xi1>
    %62 = vector.broadcast %50 : i32 to vector<16x1xi32>
    %63 = arith.addi %52, %62 : vector<16x1xi32>
    %64 = arith.select %61, %63, %52 : vector<16x1xi1>, vector<16x1xi32>
    %c15_i32 = arith.constant 15 : i32
    %65 = vector.broadcast %c15_i32 : i32 to vector<16x1xi32>
    %66 = arith.cmpi ne, %64, %65 : vector<16x1xi32>
    %c0_i32_24 = arith.constant 0 : i32
    %67 = vector.broadcast %c0_i32_24 : i32 to vector<16x1xi32>
    %68 = arith.cmpi ne, %64, %67 : vector<16x1xi32>
    %cst_25 = arith.constant 0.000000e+00 : f32
    %69 = vector.broadcast %cst_25 : f32 to vector<1x128xf32>
    %70 = vector.extract_strided_slice %10 {offsets = [1, 0], sizes = [15, 128], strides = [1, 1]} : vector<16x128xf32> to vector<15x128xf32>
    %71 = tpu.concatenate %70, %69 in 0 : vector<15x128xf32>, vector<1x128xf32> -> vector<16x128xf32>
    %72 = vector.extract_strided_slice %10 {offsets = [0, 0], sizes = [15, 128], strides = [1, 1]} : vector<16x128xf32> to vector<15x128xf32>
    %73 = tpu.concatenate %69, %72 in 0 : vector<1x128xf32>, vector<15x128xf32> -> vector<16x128xf32>
    %cst_26 = arith.constant 0.000000e+00 : f32
    %74 = vector.shape_cast %66 : vector<16x1xi1> to vector<16x1xi1>
    %75 = vector.broadcast %74 : vector<16x1xi1> to vector<16x128xi1>
    %76 = vector.broadcast %cst_26 : f32 to vector<16x128xf32>
    %77 = arith.select %75, %71, %76 : vector<16x128xi1>, vector<16x128xf32>
    %cst_27 = arith.constant 0.000000e+00 : f32
    %78 = vector.shape_cast %68 : vector<16x1xi1> to vector<16x1xi1>
    %79 = vector.broadcast %78 : vector<16x1xi1> to vector<16x128xi1>
    %80 = vector.broadcast %cst_27 : f32 to vector<16x128xf32>
    %81 = arith.select %79, %73, %80 : vector<16x128xi1>, vector<16x128xf32>
    %82 = vector.shape_cast %47 : vector<1x128xi1> to vector<1x128xi1>
    %83 = vector.broadcast %82 : vector<1x128xi1> to vector<16x128xi1>
    %84 = arith.select %83, %81, %10 : vector<16x128xi1>, vector<16x128xf32>
    %85 = vector.shape_cast %29 : vector<1x128xi1> to vector<1x128xi1>
    %86 = vector.broadcast %85 : vector<1x128xi1> to vector<16x128xi1>
    %87 = arith.select %86, %77, %84 : vector<16x128xi1>, vector<16x128xf32>
    %c0_28 = arith.constant 0 : index
    %c0_29 = arith.constant 0 : index
    %88 = vector.load %arg3[%c0_28, %c0_29] : memref<128x128xf32, #tpu.memory_space<vmem>>, vector<128x128xf32>
    %cst_30 = arith.constant dense<0.000000e+00> : vector<16x128xf32>
    %89 = tpu.matmul %87, %88, %cst_30 {dimension_numbers = #tpu.dot_dimension_numbers<[1], [0], [0], [1], [0, 0, 1, 1], [], []>} : vector<16x128xf32>, vector<128x128xf32>, vector<16x128xf32> -> vector<16x128xf32>
    %c0_31 = arith.constant 0 : index
    %c0_32 = arith.constant 0 : index
    %90 = vector.load %arg6[%c0_31, %c0_32] : memref<16x128xf32, #tpu.memory_space<vmem>>, vector<16x128xf32>
    tpu.vector_store %arg6[%c0_31, %c0_32], %89 {strides = array<i32>} : memref<16x128xf32, #tpu.memory_space<vmem>>, vector<16x128xf32>,
    %cst_33 = arith.constant dense<0.000000e+00> : vector<128xf32>
    %91 = vector.multi_reduction <add>, %89, %cst_33 [0] : vector<16x128xf32> to vector<128xf32>
    %92 = vector.shape_cast %91 : vector<128xf32> to vector<1x128xf32>
    %93 = arith.mulf %89, %89 : vector<16x128xf32>
    %cst_34 = arith.constant dense<0.000000e+00> : vector<128xf32>
    %94 = vector.multi_reduction <add>, %93, %cst_34 [0] : vector<16x128xf32> to vector<128xf32>
    %95 = vector.shape_cast %94 : vector<128xf32> to vector<1x128xf32>
    %96 = tpu.concatenate %92, %95 in 0 : vector<1x128xf32>, vector<1x128xf32> -> vector<2x128xf32>
    %97 = vector.shape_cast %96 : vector<2x128xf32> to vector<1x2x128xf32>
    %c0_35 = arith.constant 0 : index
    %c0_36 = arith.constant 0 : index
    %c0_37 = arith.constant 0 : index
    %98 = vector.load %arg7[%c0_35, %c0_36, %c0_37] : memref<1x2x128xf32, #tpu.memory_space<vmem>>, vector<1x2x128xf32>
    tpu.vector_store %arg7[%c0_35, %c0_36, %c0_37], %97 {strides = array<i32>} : memref<1x2x128xf32, #tpu.memory_space<vmem>>, vector<1x2x128xf32>,
    return
  }
  func.func @transform_0(%arg0: i32) -> (i32, i32) {
    %c0_i32 = arith.constant 0 : i32
    %c0_i32_0 = arith.constant 0 : i32
    return %arg0, %c0_i32 : i32, i32
  }
  func.func @transform_1(%arg0: i32) -> (i32, i32) {
    %c0_i32 = arith.constant 0 : i32
    %c0_i32_0 = arith.constant 0 : i32
    %c0_i32_1 = arith.constant 0 : i32
    return %c0_i32, %c0_i32_0 : i32, i32
  }
  func.func @transform_2(%arg0: i32) -> (i32, i32) {
    %c0_i32 = arith.constant 0 : i32
    %c0_i32_0 = arith.constant 0 : i32
    %c0_i32_1 = arith.constant 0 : i32
    return %c0_i32, %c0_i32_0 : i32, i32
  }
  func.func @transform_3(%arg0: i32) -> (i32, i32) {
    %c0_i32 = arith.constant 0 : i32
    %c0_i32_0 = arith.constant 0 : i32
    %c0_i32_1 = arith.constant 0 : i32
    return %c0_i32, %c0_i32_0 : i32, i32
  }
  func.func @transform_4(%arg0: i32) -> (i32, i32) {
    %c0_i32 = arith.constant 0 : i32
    %c0_i32_0 = arith.constant 0 : i32
    %c0_i32_1 = arith.constant 0 : i32
    return %c0_i32, %c0_i32_0 : i32, i32
  }
  func.func @transform_5(%arg0: i32) -> (i32, i32) {
    %c0_i32 = arith.constant 0 : i32
    %c0_i32_0 = arith.constant 0 : i32
    return %arg0, %c0_i32 : i32, i32
  }
  func.func @transform_6(%arg0: i32) -> (i32, i32, i32) {
    %c0_i32 = arith.constant 0 : i32
    %c0_i32_0 = arith.constant 0 : i32
    %c0_i32_1 = arith.constant 0 : i32
    return %arg0, %c0_i32, %c0_i32_0 : i32, i32, i32
  }
}

module attributes {stable_mosaic.version = 11 : i64} {
  func.func @_bn2_apply_kernel(%arg0: i32, %arg1: memref<16x128xf32, #tpu.memory_space<vmem>>, %arg2: memref<1x128xf32, #tpu.memory_space<vmem>>, %arg3: memref<1x128xf32, #tpu.memory_space<vmem>>, %arg4: memref<16x128xf32, #tpu.memory_space<vmem>>) attributes {dimension_semantics = [#tpu.dimension_semantics<parallel>], iteration_bounds = array<i64: 2>, scalar_prefetch = 0 : i64, scratch_operands = 0 : i64, tpu.core_type = #tpu.core_type<tc>, window_params = [{transform_indices = @transform_0, window_bounds = array<i64: 16, 128>}, {pipeline_mode = #tpu.pipeline_mode<synchronous>, transform_indices = @transform_1, window_bounds = array<i64: 1, 128>}, {pipeline_mode = #tpu.pipeline_mode<synchronous>, transform_indices = @transform_2, window_bounds = array<i64: 1, 128>}, {transform_indices = @transform_3, window_bounds = array<i64: 16, 128>}]} {
    %c0 = arith.constant 0 : index
    %c0_0 = arith.constant 0 : index
    %0 = vector.load %arg1[%c0, %c0_0] : memref<16x128xf32, #tpu.memory_space<vmem>>, vector<16x128xf32>
    %c0_1 = arith.constant 0 : index
    %c0_2 = arith.constant 0 : index
    %1 = vector.load %arg2[%c0_1, %c0_2] : memref<1x128xf32, #tpu.memory_space<vmem>>, vector<1x128xf32>
    %2 = vector.broadcast %1 : vector<1x128xf32> to vector<16x128xf32>
    %3 = arith.mulf %0, %2 : vector<16x128xf32>
    %c0_3 = arith.constant 0 : index
    %c0_4 = arith.constant 0 : index
    %4 = vector.load %arg3[%c0_3, %c0_4] : memref<1x128xf32, #tpu.memory_space<vmem>>, vector<1x128xf32>
    %5 = vector.broadcast %4 : vector<1x128xf32> to vector<16x128xf32>
    %6 = arith.addf %3, %5 : vector<16x128xf32>
    %c0_5 = arith.constant 0 : index
    %c0_6 = arith.constant 0 : index
    %7 = vector.load %arg4[%c0_5, %c0_6] : memref<16x128xf32, #tpu.memory_space<vmem>>, vector<16x128xf32>
    tpu.vector_store %arg4[%c0_5, %c0_6], %6 {strides = array<i32>} : memref<16x128xf32, #tpu.memory_space<vmem>>, vector<16x128xf32>,
    return
  }
  func.func @transform_0(%arg0: i32) -> (i32, i32) {
    %c0_i32 = arith.constant 0 : i32
    %c0_i32_0 = arith.constant 0 : i32
    return %arg0, %c0_i32 : i32, i32
  }
  func.func @transform_1(%arg0: i32) -> (i32, i32) {
    %c0_i32 = arith.constant 0 : i32
    %c0_i32_0 = arith.constant 0 : i32
    %c0_i32_1 = arith.constant 0 : i32
    return %c0_i32, %c0_i32_0 : i32, i32
  }
  func.func @transform_2(%arg0: i32) -> (i32, i32) {
    %c0_i32 = arith.constant 0 : i32
    %c0_i32_0 = arith.constant 0 : i32
    %c0_i32_1 = arith.constant 0 : i32
    return %c0_i32, %c0_i32_0 : i32, i32
  }
  func.func @transform_3(%arg0: i32) -> (i32, i32) {
    %c0_i32 = arith.constant 0 : i32
    %c0_i32_0 = arith.constant 0 : i32
    return %arg0, %c0_i32 : i32, i32
  }
}

</mosaic_0001>

<llo_original>
// kernel: tpu_custom_call.1
$region0: #{tpu_custom_call.1}
  #allocation0 [shape = 'u32[]', space=smem, size = 0x4, offset = 0x4, fixed_abs, tag = 'smem constant byte address 0x4 - core index']
  #allocation1 [shape = 'u32[144,128]{1,0:T(1,128)}', space=vmem, size = 0x12000, scoped, tag = 'internal scratch']
  %s0 = inlined_call_operand.hbm [shape: f32[8,128], index: 0, kind: input, shape index: {}]
  %s1 = inlined_call_operand.hbm [shape: f32[8,128], index: 1, kind: output, shape index: {}]
  %s2 = sld [smem:[#allocation0]]
  $region18: #{tpu_custom_call.1} parent=0
    _
  %s4 = ssub.s32 1, %s2
  %s5 = scalar_select 0, %s4, %s2
  $region1: #{tpu_custom_call.1} parent=0
    #allocation2 [shape = 'u8[4096]{0}', space=vmem, size = 0x1000, scoped, tag = 'input window, operand 0, single buffered']
    #allocation3 [shape = 's32[1]{0}', space=sflag, size = 0x4, scoped, tag = 'scoped memory for tpu_custom_call.1']
    #allocation4 [shape = 's32[1]{0}', space=sflag, size = 0x4, scoped, tag = 'scoped memory for tpu_custom_call.1']
    #allocation5 [shape = 'u8[4096]{0}', space=vmem, size = 0x1000, scoped, tag = 'output window, operand 0, single buffered']
    %6 = vsyncpa [#allocation3], 0
    %7 = vsyncpa [#allocation4], 0
    // Predicated region
    $region2: #{tpu_custom_call.1} parent=1 // pred_check
      _
    $region3: #{tpu_custom_call.1} parent=1 // pred_check_branch
      %9 = sbr.rel (0) target = $region5
    $region4: #{tpu_custom_call.1} parent=1 // pred_region
      %s11 = ssub.s32 128, 128
      %12 = vsyncadd [#allocation3], %s11
      %s14 = sshll.u32 [#allocation2], 4
      %s15 = int_to_ptr.vmem [resolvable:$true] %s14
      %17 = dma.hbm_to_vmem [thread:$0]  %s0, 128, %s15, [#allocation3]
    $region5: #{tpu_custom_call.1} parent=1 // pred_fallthru
      _
    // Predicated region
    $region6: #{tpu_custom_call.1} parent=1 // pred_check
      _
    $region7: #{tpu_custom_call.1} parent=1 // pred_check_branch
      %19 = sbr.rel (0) target = $region9
    $region8: #{tpu_custom_call.1} parent=1 // pred_region
      %20 = dma.done [#allocation3], 128
    $region9: #{tpu_custom_call.1} parent=1 // pred_fallthru
      _
    %v21 = vld [vmem:[#allocation2] sm:$0xff]
    %v22 = vrot.slane %v21, 7
    %23 = vst [vmem:[#allocation5] sm:$0xff] %v22
    // Predicated region
    $region10: #{tpu_custom_call.1} parent=1 // pred_check
      _
    $region11: #{tpu_custom_call.1} parent=1 // pred_check_branch
      %25 = sbr.rel (0) target = $region13
    $region12: #{tpu_custom_call.1} parent=1 // pred_region
      %s27 = ssub.s32 128, 128
      %28 = vsyncadd [#allocation4], %s27
      %s30 = sshll.u32 [#allocation5], 4
      %s31 = int_to_ptr.vmem [resolvable:$true] %s30
      %33 = dma.vmem_to_hbm [thread:$0]  %s31, 128, %s1, [#allocation4]
    $region13: #{tpu_custom_call.1} parent=1 // pred_fallthru
      _
    // Predicated region
    $region14: #{tpu_custom_call.1} parent=1 // pred_check
      _
    $region15: #{tpu_custom_call.1} parent=1 // pred_check_branch
      %35 = sbr.rel (0) target = $region17
    $region16: #{tpu_custom_call.1} parent=1 // pred_region
      %36 = dma.done [#allocation4], 128
    $region17: #{tpu_custom_call.1} parent=1 // pred_fallthru
      _
    %37 = vsyncpa [#allocation3], 1
    %38 = vsyncpa [#allocation4], 1

// kernel: _gts_conv_unit_impl.3
$region0: #{_gts_conv_unit_impl.3}
  #allocation0 [shape = 'u32[]', space=smem, size = 0x4, offset = 0x4, fixed_abs, tag = 'smem constant byte address 0x4 - core index']
  #allocation1 [shape = 'u32[144,128]{1,0:T(1,128)}', space=vmem, size = 0x12000, scoped, tag = 'internal scratch']
  %s0 = inlined_call_operand.vmem [shape: f32[32,128], index: 0, kind: input, shape index: {}]
  %s1 = inlined_call_operand.vmem [shape: f32[128,128], index: 1, kind: input, shape index: {}]
  %s2 = inlined_call_operand.vmem [shape: f32[2,2,128], index: 2, kind: output, shape index: {}]
  %s3 = sld [smem:[#allocation0]]
  $region41: #{_gts_conv_unit_impl.3} parent=0
    _
  %s5 = ssub.s32 1, %s3
  %s6 = scalar_select 0, %s5, %s3
  loop: start=0, step=1, limit=4
  $region2: #{_gts_conv_unit_impl.3} parent=0 // loop_pre_header
    _
  $region3: #{_gts_conv_unit_impl.3} parent=0 // loop_header
    %s8 = sphi 0, %s12
    %p9 = scmp.ge.s32.totalorder %s8, 4
    %s18 = sphi 0, %s20
    %s21 = sphi 0, %s18
    %s22 = sphi 0, %s21
    %s38 = sphi 0, %s22
    %s42 = sphi 0, %s42
    %s44 = sphi 0, %s42
    %s45 = sphi 0, %s44
    %s59 = sphi 0, %s45
    %s65 = sphi 0, %s67
    %s68 = sphi 0, %s65
    %s69 = sphi 0, %s68
    %s85 = sphi 0, %s69
  $region4: #{_gts_conv_unit_impl.3} parent=0 // loop_header_branch
    %11 = sbr.rel (%p9) target = $region8
  $region5: #{_gts_conv_unit_impl.3} parent=0 // loop_body
    %s13 = ssub.s32 %s8, 1
    %s14 = ssub.s32 %s8, 2
    %s15 = sadd.s32 %s8, 1
    %s16 = ssub.s32 %s8, %s15
    %p17 = scmp.eq.s32.totalorder %s16, 0
    %s19 = sadd.s32 %s18, 1
    %s20 = scalar_select %p17, %s18, %s19
    %p23 = pneg %p17
    %p24 = scmp.eq.s32.totalorder %s8, 1
    %p25 = por %p23, %p24
    %p26 = scmp.ne.s32.totalorder %s18, %s21
    %p27 = scmp.eq.s32.totalorder %s8, 0
    %p28 = por %p26, %p27
    %p29 = scmp.ne.s32.totalorder %s18, %s21
    %p30 = scmp.eq.s32.totalorder %s13, 1
    %p31 = por %p29, %p30
    %p32 = scmp.ne.s32.totalorder %s21, %s22
    %p33 = scmp.eq.s32.totalorder %s13, 0
    %p34 = por %p32, %p33
    %p35 = scmp.ne.s32.totalorder %s21, %s22
    %p36 = scmp.eq.s32.totalorder %s14, 1
    %p37 = por %p35, %p36
    %p39 = scmp.ne.s32.totalorder %s22, %s38
    %p40 = scmp.eq.s32.totalorder %s14, 0
    %p41 = por %p39, %p40
    %s43 = sadd.s32 %s42, 1
    %p46 = scmp.eq.s32.totalorder %s8, 1
    %p47 = scmp.ne.s32.totalorder %s42, %s44
    %p48 = scmp.eq.s32.totalorder %s8, 0
    %p49 = por %p47, %p48
    %p50 = scmp.ne.s32.totalorder %s42, %s44
    %p51 = scmp.eq.s32.totalorder %s13, 1
    %p52 = por %p50, %p51
    %p53 = scmp.ne.s32.totalorder %s44, %s45
    %p54 = scmp.eq.s32.totalorder %s13, 0
    %p55 = por %p53, %p54
    %p56 = scmp.ne.s32.totalorder %s44, %s45
    %p57 = scmp.eq.s32.totalorder %s14, 1
    %p58 = por %p56, %p57
    %p60 = scmp.ne.s32.totalorder %s45, %s59
    %p61 = scmp.eq.s32.totalorder %s14, 0
    %p62 = por %p60, %p61
    %s63 = ssub.s32 %s8, %s15
    %p64 = scmp.eq.s32.totalorder %s63, 0
    %s66 = sadd.s32 %s65, 1
    %s67 = scalar_select %p64, %s65, %s66
    %p70 = pneg %p64
    %p71 = scmp.eq.s32.totalorder %s8, 1
    %p72 = por %p70, %p71
    %p73 = scmp.ne.s32.totalorder %s65, %s68
    %p74 = scmp.eq.s32.totalorder %s8, 0
    %p75 = por %p73, %p74
    %p76 = scmp.ne.s32.totalorder %s65, %s68
    %p77 = scmp.eq.s32.totalorder %s13, 1
    %p78 = por %p76, %p77
    %p79 = scmp.ne.s32.totalorder %s68, %s69
    %p80 = scmp.eq.s32.totalorder %s13, 0
    %p81 = por %p79, %p80
    %p82 = scmp.ne.s32.totalorder %s68, %s69
    %p83 = scmp.eq.s32.totalorder %s14, 1
    %p84 = por %p82, %p83
    %p86 = scmp.ne.s32.totalorder %s69, %s85
    %p87 = scmp.eq.s32.totalorder %s14, 0
    %p88 = por %p86, %p87
    %p89 = scmp.le.s32.totalorder 1, %s8
    %p90 = scmp.lt.s32.totalorder %s8, 3
    %p91 = pnand %p89, %p90
    %p92 = pneg %p91
    // Predicated region
    $region9: #{_gts_conv_unit_impl.3} parent=5 // pred_check
      _
    $region10: #{_gts_conv_unit_impl.3} parent=5 // pred_check_branch
      %94 = sbr.rel (%p91) target = $region12
    $region11: #{_gts_conv_unit_impl.3} parent=5 // pred_region
      %s95 = ssub.s32 %s8, 1
      // Predicated region
      $region13: #{_gts_conv_unit_impl.3} parent=11 // pred_check
        %p96 = pneg %p55
      $region14: #{_gts_conv_unit_impl.3} parent=11 // pred_check_branch
        %98 = sbr.rel (%p96) target = $region16
      $region15: #{_gts_conv_unit_impl.3} parent=11 // pred_region
        _
      $region16: #{_gts_conv_unit_impl.3} parent=11 // pred_fallthru
        _
    $region12: #{_gts_conv_unit_impl.3} parent=5 // pred_fallthru
      _
    %p99 = scmp.lt.s32.totalorder %s8, 2
    // Predicated region
    $region17: #{_gts_conv_unit_impl.3} parent=5 // pred_check
      %p100 = pneg %p99
    $region18: #{_gts_conv_unit_impl.3} parent=5 // pred_check_branch
      %102 = sbr.rel (%p100) target = $region20
    $region19: #{_gts_conv_unit_impl.3} parent=5 // pred_region
      // Predicated region
      $region21: #{_gts_conv_unit_impl.3} parent=19 // pred_check
        %p103 = pneg %p28
      $region22: #{_gts_conv_unit_impl.3} parent=19 // pred_check_branch
        %105 = sbr.rel (%p103) target = $region24
      $region23: #{_gts_conv_unit_impl.3} parent=19 // pred_region
        %s106 = smul.u32 2, %s8
        %p107 = scmp.lt.s32.totalorder %s106, 3
        %s108 = scalar_select %p107, %s106, 3
        %s109 = smul.addr %s108, 8
        %s110 = scalar_lea.vmem %s0, %s109
        %s111 = smul.u32 2, %s8
      $region24: #{_gts_conv_unit_impl.3} parent=19 // pred_fallthru
        _
    $region20: #{_gts_conv_unit_impl.3} parent=5 // pred_fallthru
      _
    %p112 = scmp.le.s32.totalorder 1, %s8
    %p113 = scmp.lt.s32.totalorder %s8, 3
    %p114 = pnand %p112, %p113
    %p115 = pneg %p114
    // Predicated region
    $region25: #{_gts_conv_unit_impl.3} parent=5 // pred_check
      _
    $region26: #{_gts_conv_unit_impl.3} parent=5 // pred_check_branch
      %117 = sbr.rel (%p114) target = $region28
    $region27: #{_gts_conv_unit_impl.3} parent=5 // pred_region
      %s118 = ssub.s32 %s8, 1
      %s119 = smul.u32 2, %s13
      %p120 = scmp.lt.s32.totalorder %s119, 3
      %s121 = scalar_select %p120, %s119, 3
      %s122 = smul.addr %s121, 8
      %s123 = scalar_lea.vmem %s0, %s122
      %p124 = pneg %p34
      %p125 = pneg %p31
      %p126 = pneg %p55
      %p127 = pneg %p52
      %p128 = pneg %p81
      %p129 = pneg %p78
      %p130 = scmp.lt.s32.totalorder %s13, 1
      %s131 = scalar_select %p130, %s13, 1
      %s132 = smul.addr %s131, 2
      %s133 = scalar_lea.vmem %s2, %s132
      %s134 = smul.u32 2, %s13
      %p135 = scmp.lt.s32.totalorder %s134, 3
      %s136 = scalar_select %p135, %s134, 3
      %s137 = smul.addr %s136, 8
      %s138 = scalar_lea.vmem %s0, %s137
      %s139 = smul.u32 2, %s13
      %p140 = scmp.lt.s32.totalorder %s13, 1
      %s141 = scalar_select %p140, %s13, 1
      %s142 = smul.addr %s141, 2
      %s143 = scalar_lea.vmem %s2, %s142
      %v144 = vld [vmem:[%s138] sm:$0xff]
      %v145 = vld [vmem:[%s138 + $0x8] sm:$0xff]
      %v146 = vld [vmem:[%s1] sm:$0xff]
      %v147 = vld [vmem:[%s1 + $0x8] sm:$0xff]
      %v148 = vld [vmem:[%s1 + $0x10] sm:$0xff]
      %v149 = vld [vmem:[%s1 + $0x18] sm:$0xff]
      %v150 = vld [vmem:[%s1 + $0x20] sm:$0xff]
      %v151 = vld [vmem:[%s1 + $0x28] sm:$0xff]
      %v152 = vld [vmem:[%s1 + $0x30] sm:$0xff]
      %v153 = vld [vmem:[%s1 + $0x38] sm:$0xff]
      %v154 = vld [vmem:[%s1 + $0x40] sm:$0xff]
      %v155 = vld [vmem:[%s1 + $0x48] sm:$0xff]
      %v156 = vld [vmem:[%s1 + $0x50] sm:$0xff]
      %v157 = vld [vmem:[%s1 + $0x58] sm:$0xff]
      %v158 = vld [vmem:[%s1 + $0x60] sm:$0xff]
      %v159 = vld [vmem:[%s1 + $0x68] sm:$0xff]
      %v160 = vld [vmem:[%s1 + $0x70] sm:$0xff]
      %v161 = vld [vmem:[%s1 + $0x78] sm:$0xff]
      %162 = vmatprep.subr.mxu0 0.0
      %163 = vmatpush1.msra.mxu0 %v146
      %164 = vmatprep.subr.mxu0 0.0
      %165 = vmatpush1.msra.mxu0 %v147
      %166 = vmatprep.subr.mxu0 0.0
      %167 = vmatpush1.msra.mxu0 %v148
      %168 = vmatprep.subr.mxu0 0.0
      %169 = vmatpush1.msra.mxu0 %v149
      %170 = vmatprep.subr.mxu0 0.0
      %171 = vmatpush1.msra.mxu0 %v150
      %172 = vmatprep.subr.mxu0 0.0
      %173 = vmatpush1.msra.mxu0 %v151
      %174 = vmatprep.subr.mxu0 0.0
      %175 = vmatpush1.msra.mxu0 %v152
      %176 = vmatprep.subr.mxu0 0.0
      %177 = vmatpush1.msra.mxu0 %v153
      %178 = vmatprep.subr.mxu0 0.0
      %179 = vmatpush1.msra.mxu0 %v154
      %180 = vmatprep.subr.mxu0 0.0
      %181 = vmatpush1.msra.mxu0 %v155
      %182 = vmatprep.subr.mxu0 0.0
      %183 = vmatpush1.msra.mxu0 %v156
      %184 = vmatprep.subr.mxu0 0.0
      %185 = vmatpush1.msra.mxu0 %v157
      %186 = vmatprep.subr.mxu0 0.0
      %187 = vmatpush1.msra.mxu0 %v158
      %188 = vmatprep.subr.mxu0 0.0
      %189 = vmatpush1.msra.mxu0 %v159
      %190 = vmatprep.subr.mxu0 0.0
      %191 = vmatpush1.msra.mxu0 %v160
      %192 = vmatprep.subr.mxu0 0.0
      %193 = vmatpush1.msra.mxu0 %v161
      %194 = vmatprep.subr.mxu0 0.0
      %195 = vmatpush1.msra.mxu0 0.0
      %196 = vmatprep.subr.mxu0 0.0
      %197 = vmatpush1.msra.mxu0 0.0
      %198 = vmatprep.subr.mxu0 0.0
      %199 = vmatpush1.msra.mxu0 0.0
      %200 = vmatprep.subr.mxu0 0.0
      %201 = vmatpush1.msra.mxu0 0.0
      %202 = vmatprep.subr.mxu0 0.0
      %203 = vmatpush1.msra.mxu0 0.0
      %204 = vmatprep.subr.mxu0 0.0
      %205 = vmatpush1.msra.mxu0 0.0
      %206 = vmatprep.subr.mxu0 0.0
      %207 = vmatpush1.msra.mxu0 0.0
      %208 = vmatprep.subr.mxu0 0.0
      %209 = vmatpush1.msra.mxu0 0.0
      %210 = vmatprep.subr.mxu0 0.0
      %211 = vmatpush1.msra.mxu0 0.0
      %212 = vmatprep.subr.mxu0 0.0
      %213 = vmatpush1.msra.mxu0 0.0
      %214 = vmatprep.subr.mxu0 0.0
      %215 = vmatpush1.msra.mxu0 0.0
      %216 = vmatprep.subr.mxu0 0.0
      %217 = vmatpush1.msra.mxu0 0.0
      %218 = vmatprep.subr.mxu0 0.0
      %219 = vmatpush1.msra.mxu0 0.0
      %220 = vmatprep.subr.mxu0 0.0
      %221 = vmatpush1.msra.mxu0 0.0
      %222 = vmatprep.subr.mxu0 0.0
      %223 = vmatpush1.msra.mxu0 0.0
      %224 = vmatprep.subr.mxu0 0.0
      %225 = vmatpush1.msra.mxu0 0.0
      %226 = vmatprep.mubr.f32.mxu0 0.0
      %227 = vmatmul.mubr.f32.gmra.mrb[0].mxu0 %v144
      %v228 = vpop.f32.mrb[0].mxu0
      %v229 = vadd.f32 0.0, %v228
      %v230 = vpop.f32.mrb[0].mxu0
      %231 = vmatprep.mubr.f32.mxu0 0.0
      %232 = vmatmul.mubr.f32.gmra.mrb[0].mxu0 %v145
      %v233 = vpop.f32.mrb[0].mxu0
      %v234 = vadd.f32 0.0, %v233
      %v235 = vpop.f32.mrb[0].mxu0
      %236 = vdwg.mxu0
      %v237 = vadd.f32 %v229, %v234
      %v238 = vrot.slane %v237, 4
      %v239 = vadd.f32 %v237, %v238
      %v240 = vrot.slane %v239, 2
      %v241 = vadd.f32 %v239, %v240
      %v242 = vrot.slane %v241, 1
      %v243 = vadd.f32 %v241, %v242
      %v244 = vmul.f32 %v229, %v229
      %v245 = vmul.f32 %v234, %v234
      %v246 = vadd.f32 %v244, %v245
      %v247 = vrot.slane %v246, 4
      %v248 = vadd.f32 %v246, %v247
      %v249 = vrot.slane %v248, 2
      %v250 = vadd.f32 %v248, %v249
      %v251 = vrot.slane %v250, 1
      %v252 = vadd.f32 %v250, %v251
      %vm253 = vcmask 1040384
      %v254 = vsel %vm253, %v243, %v252
      %255 = vst [vmem:[%s143] sm:$0x3] %v254
      %p256 = scmp.lt.s32.totalorder %s13, 1
      %s257 = scalar_select %p256, %s13, 1
      %s258 = smul.addr %s257, 2
      %s259 = scalar_lea.vmem %s2, %s258
      // Predicated region
      $region29: #{_gts_conv_unit_impl.3} parent=27 // pred_check
        %p260 = pneg %p78
      $region30: #{_gts_conv_unit_impl.3} parent=27 // pred_check_branch
        %262 = sbr.rel (%p260) target = $region32
      $region31: #{_gts_conv_unit_impl.3} parent=27 // pred_region
        _
      $region32: #{_gts_conv_unit_impl.3} parent=27 // pred_fallthru
        _
    $region28: #{_gts_conv_unit_impl.3} parent=5 // pred_fallthru
      _
    %p263 = scmp.le.s32.totalorder 2, %s8
    // Predicated region
    $region33: #{_gts_conv_unit_impl.3} parent=5 // pred_check
      %p264 = pneg %p263
    $region34: #{_gts_conv_unit_impl.3} parent=5 // pred_check_branch
      %266 = sbr.rel (%p264) target = $region36
    $region35: #{_gts_conv_unit_impl.3} parent=5 // pred_region
      %s267 = ssub.s32 %s8, 2
      // Predicated region
      $region37: #{_gts_conv_unit_impl.3} parent=35 // pred_check
        %p268 = pneg %p84
      $region38: #{_gts_conv_unit_impl.3} parent=35 // pred_check_branch
        %270 = sbr.rel (%p268) target = $region40
      $region39: #{_gts_conv_unit_impl.3} parent=35 // pred_region
        %p271 = scmp.lt.s32.totalorder %s14, 1
        %s272 = scalar_select %p271, %s14, 1
        %s273 = smul.addr %s272, 2
        %s274 = scalar_lea.vmem %s2, %s273
      $region40: #{_gts_conv_unit_impl.3} parent=35 // pred_fallthru
        _
    $region36: #{_gts_conv_unit_impl.3} parent=5 // pred_fallthru
      _
  $region6: #{_gts_conv_unit_impl.3} parent=0 // loop_footer
    %s12 = sadd.s32 1, %s8
  $region7: #{_gts_conv_unit_impl.3} parent=0 // loop_footer_branch
    %7 = sbr.rel target = $region3
  $region8: #{_gts_conv_unit_impl.3} parent=0 // loop_exit
    _

// kernel: _gts_conv_unit_impl.5
$region0: #{_gts_conv_unit_impl.5}
  #allocation0 [shape = 'u32[]', space=smem, size = 0x4, offset = 0x4, fixed_abs, tag = 'smem constant byte address 0x4 - core index']
  #allocation1 [shape = 'u32[144,128]{1,0:T(1,128)}', space=vmem, size = 0x12000, scoped, tag = 'internal scratch']
  %s0 = inlined_call_operand.vmem [shape: f32[32,128], index: 0, kind: input, shape index: {}]
  %s1 = inlined_call_operand.vmem [shape: f32[1,128], index: 1, kind: input, shape index: {}]
  %s2 = inlined_call_operand.vmem [shape: f32[1,128], index: 2, kind: input, shape index: {}]
  %s3 = inlined_call_operand.vmem [shape: f32[32,128], index: 3, kind: output, shape index: {}]
  %s4 = sld [smem:[#allocation0]]
  $region45: #{_gts_conv_unit_impl.5} parent=0
    _
  %s6 = ssub.s32 1, %s4
  %s7 = scalar_select 0, %s6, %s4
  loop: start=0, step=1, limit=4
  $region2: #{_gts_conv_unit_impl.5} parent=0 // loop_pre_header
    _
  $region3: #{_gts_conv_unit_impl.5} parent=0 // loop_header
    %s9 = sphi 0, %s13
    %p10 = scmp.ge.s32.totalorder %s9, 4
    %s19 = sphi 0, %s21
    %s22 = sphi 0, %s19
    %s23 = sphi 0, %s22
    %s39 = sphi 0, %s23
    %s43 = sphi 0, %s43
    %s45 = sphi 0, %s43
    %s46 = sphi 0, %s45
    %s60 = sphi 0, %s46
    %s64 = sphi 0, %s64
    %s66 = sphi 0, %s64
    %s67 = sphi 0, %s66
    %s81 = sphi 0, %s67
    %s87 = sphi 0, %s89
    %s90 = sphi 0, %s87
    %s91 = sphi 0, %s90
    %s107 = sphi 0, %s91
  $region4: #{_gts_conv_unit_impl.5} parent=0 // loop_header_branch
    %12 = sbr.rel (%p10) target = $region8
  $region5: #{_gts_conv_unit_impl.5} parent=0 // loop_body
    %s14 = ssub.s32 %s9, 1
    %s15 = ssub.s32 %s9, 2
    %s16 = sadd.s32 %s9, 1
    %s17 = ssub.s32 %s9, %s16
    %p18 = scmp.eq.s32.totalorder %s17, 0
    %s20 = sadd.s32 %s19, 1
    %s21 = scalar_select %p18, %s19, %s20
    %p24 = pneg %p18
    %p25 = scmp.eq.s32.totalorder %s9, 1
    %p26 = por %p24, %p25
    %p27 = scmp.ne.s32.totalorder %s19, %s22
    %p28 = scmp.eq.s32.totalorder %s9, 0
    %p29 = por %p27, %p28
    %p30 = scmp.ne.s32.totalorder %s19, %s22
    %p31 = scmp.eq.s32.totalorder %s14, 1
    %p32 = por %p30, %p31
    %p33 = scmp.ne.s32.totalorder %s22, %s23
    %p34 = scmp.eq.s32.totalorder %s14, 0
    %p35 = por %p33, %p34
    %p36 = scmp.ne.s32.totalorder %s22, %s23
    %p37 = scmp.eq.s32.totalorder %s15, 1
    %p38 = por %p36, %p37
    %p40 = scmp.ne.s32.totalorder %s23, %s39
    %p41 = scmp.eq.s32.totalorder %s15, 0
    %p42 = por %p40, %p41
    %s44 = sadd.s32 %s43, 1
    %p47 = scmp.eq.s32.totalorder %s9, 1
    %p48 = scmp.ne.s32.totalorder %s43, %s45
    %p49 = scmp.eq.s32.totalorder %s9, 0
    %p50 = por %p48, %p49
    %p51 = scmp.ne.s32.totalorder %s43, %s45
    %p52 = scmp.eq.s32.totalorder %s14, 1
    %p53 = por %p51, %p52
    %p54 = scmp.ne.s32.totalorder %s45, %s46
    %p55 = scmp.eq.s32.totalorder %s14, 0
    %p56 = por %p54, %p55
    %p57 = scmp.ne.s32.totalorder %s45, %s46
    %p58 = scmp.eq.s32.totalorder %s15, 1
    %p59 = por %p57, %p58
    %p61 = scmp.ne.s32.totalorder %s46, %s60
    %p62 = scmp.eq.s32.totalorder %s15, 0
    %p63 = por %p61, %p62
    %s65 = sadd.s32 %s64, 1
    %p68 = scmp.eq.s32.totalorder %s9, 1
    %p69 = scmp.ne.s32.totalorder %s64, %s66
    %p70 = scmp.eq.s32.totalorder %s9, 0
    %p71 = por %p69, %p70
    %p72 = scmp.ne.s32.totalorder %s64, %s66
    %p73 = scmp.eq.s32.totalorder %s14, 1
    %p74 = por %p72, %p73
    %p75 = scmp.ne.s32.totalorder %s66, %s67
    %p76 = scmp.eq.s32.totalorder %s14, 0
    %p77 = por %p75, %p76
    %p78 = scmp.ne.s32.totalorder %s66, %s67
    %p79 = scmp.eq.s32.totalorder %s15, 1
    %p80 = por %p78, %p79
    %p82 = scmp.ne.s32.totalorder %s67, %s81
    %p83 = scmp.eq.s32.totalorder %s15, 0
    %p84 = por %p82, %p83
    %s85 = ssub.s32 %s9, %s16
    %p86 = scmp.eq.s32.totalorder %s85, 0
    %s88 = sadd.s32 %s87, 1
    %s89 = scalar_select %p86, %s87, %s88
    %p92 = pneg %p86
    %p93 = scmp.eq.s32.totalorder %s9, 1
    %p94 = por %p92, %p93
    %p95 = scmp.ne.s32.totalorder %s87, %s90
    %p96 = scmp.eq.s32.totalorder %s9, 0
    %p97 = por %p95, %p96
    %p98 = scmp.ne.s32.totalorder %s87, %s90
    %p99 = scmp.eq.s32.totalorder %s14, 1
    %p100 = por %p98, %p99
    %p101 = scmp.ne.s32.totalorder %s90, %s91
    %p102 = scmp.eq.s32.totalorder %s14, 0
    %p103 = por %p101, %p102
    %p104 = scmp.ne.s32.totalorder %s90, %s91
    %p105 = scmp.eq.s32.totalorder %s15, 1
    %p106 = por %p104, %p105
    %p108 = scmp.ne.s32.totalorder %s91, %s107
    %p109 = scmp.eq.s32.totalorder %s15, 0
    %p110 = por %p108, %p109
    %p111 = scmp.le.s32.totalorder 1, %s9
    %p112 = scmp.lt.s32.totalorder %s9, 3
    %p113 = pnand %p111, %p112
    %p114 = pneg %p113
    // Predicated region
    $region9: #{_gts_conv_unit_impl.5} parent=5 // pred_check
      _
    $region10: #{_gts_conv_unit_impl.5} parent=5 // pred_check_branch
      %116 = sbr.rel (%p113) target = $region12
    $region11: #{_gts_conv_unit_impl.5} parent=5 // pred_region
      %s117 = ssub.s32 %s9, 1
      // Predicated region
      $region13: #{_gts_conv_unit_impl.5} parent=11 // pred_check
        %p118 = pneg %p56
      $region14: #{_gts_conv_unit_impl.5} parent=11 // pred_check_branch
        %120 = sbr.rel (%p118) target = $region16
      $region15: #{_gts_conv_unit_impl.5} parent=11 // pred_region
        _
      $region16: #{_gts_conv_unit_impl.5} parent=11 // pred_fallthru
        _
      // Predicated region
      $region17: #{_gts_conv_unit_impl.5} parent=11 // pred_check
        %p121 = pneg %p77
      $region18: #{_gts_conv_unit_impl.5} parent=11 // pred_check_branch
        %123 = sbr.rel (%p121) target = $region20
      $region19: #{_gts_conv_unit_impl.5} parent=11 // pred_region
        _
      $region20: #{_gts_conv_unit_impl.5} parent=11 // pred_fallthru
        _
    $region12: #{_gts_conv_unit_impl.5} parent=5 // pred_fallthru
      _
    %p124 = scmp.lt.s32.totalorder %s9, 2
    // Predicated region
    $region21: #{_gts_conv_unit_impl.5} parent=5 // pred_check
      %p125 = pneg %p124
    $region22: #{_gts_conv_unit_impl.5} parent=5 // pred_check_branch
      %127 = sbr.rel (%p125) target = $region24
    $region23: #{_gts_conv_unit_impl.5} parent=5 // pred_region
      // Predicated region
      $region25: #{_gts_conv_unit_impl.5} parent=23 // pred_check
        %p128 = pneg %p29
      $region26: #{_gts_conv_unit_impl.5} parent=23 // pred_check_branch
        %130 = sbr.rel (%p128) target = $region28
      $region27: #{_gts_conv_unit_impl.5} parent=23 // pred_region
        %s131 = smul.u32 2, %s9
        %p132 = scmp.lt.s32.totalorder %s131, 3
        %s133 = scalar_select %p132, %s131, 3
        %s134 = smul.addr %s133, 8
        %s135 = scalar_lea.vmem %s0, %s134
        %s136 = smul.u32 2, %s9
      $region28: #{_gts_conv_unit_impl.5} parent=23 // pred_fallthru
        _
    $region24: #{_gts_conv_unit_impl.5} parent=5 // pred_fallthru
      _
    %p137 = scmp.le.s32.totalorder 1, %s9
    %p138 = scmp.lt.s32.totalorder %s9, 3
    %p139 = pnand %p137, %p138
    %p140 = pneg %p139
    // Predicated region
    $region29: #{_gts_conv_unit_impl.5} parent=5 // pred_check
      _
    $region30: #{_gts_conv_unit_impl.5} parent=5 // pred_check_branch
      %142 = sbr.rel (%p139) target = $region32
    $region31: #{_gts_conv_unit_impl.5} parent=5 // pred_region
      %s143 = ssub.s32 %s9, 1
      %s144 = smul.u32 2, %s14
      %p145 = scmp.lt.s32.totalorder %s144, 3
      %s146 = scalar_select %p145, %s144, 3
      %s147 = smul.addr %s146, 8
      %s148 = scalar_lea.vmem %s0, %s147
      %p149 = pneg %p35
      %p150 = pneg %p32
      %p151 = pneg %p56
      %p152 = pneg %p53
      %p153 = pneg %p77
      %p154 = pneg %p74
      %p155 = pneg %p103
      %p156 = pneg %p100
      %s157 = smul.u32 2, %s14
      %p158 = scmp.lt.s32.totalorder %s157, 3
      %s159 = scalar_select %p158, %s157, 3
      %s160 = smul.addr %s159, 8
      %s161 = scalar_lea.vmem %s3, %s160
      %s162 = smul.u32 2, %s14
      %p163 = scmp.lt.s32.totalorder %s162, 3
      %s164 = scalar_select %p163, %s162, 3
      %s165 = smul.addr %s164, 8
      %s166 = scalar_lea.vmem %s0, %s165
      %s167 = smul.u32 2, %s14
      %s168 = smul.u32 2, %s14
      %p169 = scmp.lt.s32.totalorder %s168, 3
      %s170 = scalar_select %p169, %s168, 3
      %s171 = smul.addr %s170, 8
      %s172 = scalar_lea.vmem %s3, %s171
      %s173 = smul.u32 2, %s14
      %v174 = vld [vmem:[%s166] sm:$0xff]
      %v175 = vld [vmem:[%s166 + $0x8] sm:$0xff]
      %v176 = vld [vmem:[%s1] sm:$0x1]
      %v178 = vlaneseq
      %v179 = vshrl.u32 %v178, 7
      %v180 = vsub.s32 0, %v179
      %v181 = vrot.slane %v176, %v180
      %v183 = vmul.f32 %v174, %v181
      %v184 = vmul.f32 %v175, %v181
      %v185 = vld [vmem:[%s2] sm:$0x1]
      %v187 = vlaneseq
      %v188 = vshrl.u32 %v187, 7
      %v189 = vsub.s32 0, %v188
      %v190 = vrot.slane %v185, %v189
      %v192 = vadd.f32 %v183, %v190
      %v193 = vadd.f32 %v184, %v190
      %194 = vst [vmem:[%s172] sm:$0xff] %v192
      %195 = vst [vmem:[%s172 + $0x8] sm:$0xff] %v193
      %s196 = smul.u32 2, %s14
      %p197 = scmp.lt.s32.totalorder %s196, 3
      %s198 = scalar_select %p197, %s196, 3
      %s199 = smul.addr %s198, 8
      %s200 = scalar_lea.vmem %s3, %s199
      // Predicated region
      $region33: #{_gts_conv_unit_impl.5} parent=31 // pred_check
        %p201 = pneg %p100
      $region34: #{_gts_conv_unit_impl.5} parent=31 // pred_check_branch
        %203 = sbr.rel (%p201) target = $region36
      $region35: #{_gts_conv_unit_impl.5} parent=31 // pred_region
        %s204 = smul.u32 2, %s14
      $region36: #{_gts_conv_unit_impl.5} parent=31 // pred_fallthru
        _
    $region32: #{_gts_conv_unit_impl.5} parent=5 // pred_fallthru
      _
    %p205 = scmp.le.s32.totalorder 2, %s9
    // Predicated region
    $region37: #{_gts_conv_unit_impl.5} parent=5 // pred_check
      %p206 = pneg %p205
    $region38: #{_gts_conv_unit_impl.5} parent=5 // pred_check_branch
      %208 = sbr.rel (%p206) target = $region40
    $region39: #{_gts_conv_unit_impl.5} parent=5 // pred_region
      %s209 = ssub.s32 %s9, 2
      // Predicated region
      $region41: #{_gts_conv_unit_impl.5} parent=39 // pred_check
        %p210 = pneg %p106
      $region42: #{_gts_conv_unit_impl.5} parent=39 // pred_check_branch
        %212 = sbr.rel (%p210) target = $region44
      $region43: #{_gts_conv_unit_impl.5} parent=39 // pred_region
        %s213 = smul.u32 2, %s15
        %p214 = scmp.lt.s32.totalorder %s213, 3
        %s215 = scalar_select %p214, %s213, 3
        %s216 = smul.addr %s215, 8
        %s217 = scalar_lea.vmem %s3, %s216
      $region44: #{_gts_conv_unit_impl.5} parent=39 // pred_fallthru
        _
    $region40: #{_gts_conv_unit_impl.5} parent=5 // pred_fallthru
      _
  $region6: #{_gts_conv_unit_impl.5} parent=0 // loop_footer
    %s13 = sadd.s32 1, %s9
  $region7: #{_gts_conv_unit_impl.5} parent=0 // loop_footer_branch
    %8 = sbr.rel target = $region3
  $region8: #{_gts_conv_unit_impl.5} parent=0 // loop_exit
    _

// kernel: _gts_conv_unit_impl.4
$region0: #{_gts_conv_unit_impl.4}
  #allocation0 [shape = 'u32[]', space=smem, size = 0x4, offset = 0x4, fixed_abs, tag = 'smem constant byte address 0x4 - core index']
  #allocation1 [shape = 'u32[144,128]{1,0:T(1,128)}', space=vmem, size = 0x12000, scoped, tag = 'internal scratch']
  %s0 = inlined_call_operand.vmem [shape: f32[32,128], index: 0, kind: input, shape index: {}]
  %s1 = inlined_call_operand.vmem [shape: f32[128,128], index: 1, kind: input, shape index: {}]
  %s2 = inlined_call_operand.vmem [shape: f32[128,128], index: 2, kind: input, shape index: {}]
  %s3 = inlined_call_operand.vmem [shape: f32[1,128], index: 3, kind: input, shape index: {}]
  %s4 = inlined_call_operand.vmem [shape: f32[1,128], index: 4, kind: input, shape index: {}]
  %s5 = inlined_call_operand.vmem [shape: f32[32,128], index: 5, kind: output, shape index: {0}]
  %s6 = inlined_call_operand.vmem [shape: f32[2,2,128], index: 6, kind: output, shape index: {1}]
  %7 = xla_tuple %s5, %s6
  %s8 = sld [smem:[#allocation0]]
  $region61: #{_gts_conv_unit_impl.4} parent=0
    _
  %s10 = ssub.s32 1, %s8
  %s11 = scalar_select 0, %s10, %s8
  loop: start=0, step=1, limit=4
  $region2: #{_gts_conv_unit_impl.4} parent=0 // loop_pre_header
    _
  $region3: #{_gts_conv_unit_impl.4} parent=0 // loop_header
    %s13 = sphi 0, %s17
    %p14 = scmp.ge.s32.totalorder %s13, 4
    %s23 = sphi 0, %s25
    %s26 = sphi 0, %s23
    %s27 = sphi 0, %s26
    %s43 = sphi 0, %s27
    %s47 = sphi 0, %s47
    %s49 = sphi 0, %s47
    %s50 = sphi 0, %s49
    %s64 = sphi 0, %s50
    %s68 = sphi 0, %s68
    %s70 = sphi 0, %s68
    %s71 = sphi 0, %s70
    %s85 = sphi 0, %s71
    %s89 = sphi 0, %s89
    %s91 = sphi 0, %s89
    %s92 = sphi 0, %s91
    %s106 = sphi 0, %s92
    %s110 = sphi 0, %s110
    %s112 = sphi 0, %s110
    %s113 = sphi 0, %s112
    %s127 = sphi 0, %s113
    %s133 = sphi 0, %s135
    %s136 = sphi 0, %s133
    %s137 = sphi 0, %s136
    %s153 = sphi 0, %s137
    %s159 = sphi 0, %s161
    %s162 = sphi 0, %s159
    %s163 = sphi 0, %s162
    %s179 = sphi 0, %s163
  $region4: #{_gts_conv_unit_impl.4} parent=0 // loop_header_branch
    %16 = sbr.rel (%p14) target = $region8
  $region5: #{_gts_conv_unit_impl.4} parent=0 // loop_body
    %s18 = ssub.s32 %s13, 1
    %s19 = ssub.s32 %s13, 2
    %s20 = sadd.s32 %s13, 1
    %s21 = ssub.s32 %s13, %s20
    %p22 = scmp.eq.s32.totalorder %s21, 0
    %s24 = sadd.s32 %s23, 1
    %s25 = scalar_select %p22, %s23, %s24
    %p28 = pneg %p22
    %p29 = scmp.eq.s32.totalorder %s13, 1
    %p30 = por %p28, %p29
    %p31 = scmp.ne.s32.totalorder %s23, %s26
    %p32 = scmp.eq.s32.totalorder %s13, 0
    %p33 = por %p31, %p32
    %p34 = scmp.ne.s32.totalorder %s23, %s26
    %p35 = scmp.eq.s32.totalorder %s18, 1
    %p36 = por %p34, %p35
    %p37 = scmp.ne.s32.totalorder %s26, %s27
    %p38 = scmp.eq.s32.totalorder %s18, 0
    %p39 = por %p37, %p38
    %p40 = scmp.ne.s32.totalorder %s26, %s27
    %p41 = scmp.eq.s32.totalorder %s19, 1
    %p42 = por %p40, %p41
    %p44 = scmp.ne.s32.totalorder %s27, %s43
    %p45 = scmp.eq.s32.totalorder %s19, 0
    %p46 = por %p44, %p45
    %s48 = sadd.s32 %s47, 1
    %p51 = scmp.eq.s32.totalorder %s13, 1
    %p52 = scmp.ne.s32.totalorder %s47, %s49
    %p53 = scmp.eq.s32.totalorder %s13, 0
    %p54 = por %p52, %p53
    %p55 = scmp.ne.s32.totalorder %s47, %s49
    %p56 = scmp.eq.s32.totalorder %s18, 1
    %p57 = por %p55, %p56
    %p58 = scmp.ne.s32.totalorder %s49, %s50
    %p59 = scmp.eq.s32.totalorder %s18, 0
    %p60 = por %p58, %p59
    %p61 = scmp.ne.s32.totalorder %s49, %s50
    %p62 = scmp.eq.s32.totalorder %s19, 1
    %p63 = por %p61, %p62
    %p65 = scmp.ne.s32.totalorder %s50, %s64
    %p66 = scmp.eq.s32.totalorder %s19, 0
    %p67 = por %p65, %p66
    %s69 = sadd.s32 %s68, 1
    %p72 = scmp.eq.s32.totalorder %s13, 1
    %p73 = scmp.ne.s32.totalorder %s68, %s70
    %p74 = scmp.eq.s32.totalorder %s13, 0
    %p75 = por %p73, %p74
    %p76 = scmp.ne.s32.totalorder %s68, %s70
    %p77 = scmp.eq.s32.totalorder %s18, 1
    %p78 = por %p76, %p77
    %p79 = scmp.ne.s32.totalorder %s70, %s71
    %p80 = scmp.eq.s32.totalorder %s18, 0
    %p81 = por %p79, %p80
    %p82 = scmp.ne.s32.totalorder %s70, %s71
    %p83 = scmp.eq.s32.totalorder %s19, 1
    %p84 = por %p82, %p83
    %p86 = scmp.ne.s32.totalorder %s71, %s85
    %p87 = scmp.eq.s32.totalorder %s19, 0
    %p88 = por %p86, %p87
    %s90 = sadd.s32 %s89, 1
    %p93 = scmp.eq.s32.totalorder %s13, 1
    %p94 = scmp.ne.s32.totalorder %s89, %s91
    %p95 = scmp.eq.s32.totalorder %s13, 0
    %p96 = por %p94, %p95
    %p97 = scmp.ne.s32.totalorder %s89, %s91
    %p98 = scmp.eq.s32.totalorder %s18, 1
    %p99 = por %p97, %p98
    %p100 = scmp.ne.s32.totalorder %s91, %s92
    %p101 = scmp.eq.s32.totalorder %s18, 0
    %p102 = por %p100, %p101
    %p103 = scmp.ne.s32.totalorder %s91, %s92
    %p104 = scmp.eq.s32.totalorder %s19, 1
    %p105 = por %p103, %p104
    %p107 = scmp.ne.s32.totalorder %s92, %s106
    %p108 = scmp.eq.s32.totalorder %s19, 0
    %p109 = por %p107, %p108
    %s111 = sadd.s32 %s110, 1
    %p114 = scmp.eq.s32.totalorder %s13, 1
    %p115 = scmp.ne.s32.totalorder %s110, %s112
    %p116 = scmp.eq.s32.totalorder %s13, 0
    %p117 = por %p115, %p116
    %p118 = scmp.ne.s32.totalorder %s110, %s112
    %p119 = scmp.eq.s32.totalorder %s18, 1
    %p120 = por %p118, %p119
    %p121 = scmp.ne.s32.totalorder %s112, %s113
    %p122 = scmp.eq.s32.totalorder %s18, 0
    %p123 = por %p121, %p122
    %p124 = scmp.ne.s32.totalorder %s112, %s113
    %p125 = scmp.eq.s32.totalorder %s19, 1
    %p126 = por %p124, %p125
    %p128 = scmp.ne.s32.totalorder %s113, %s127
    %p129 = scmp.eq.s32.totalorder %s19, 0
    %p130 = por %p128, %p129
    %s131 = ssub.s32 %s13, %s20
    %p132 = scmp.eq.s32.totalorder %s131, 0
    %s134 = sadd.s32 %s133, 1
    %s135 = scalar_select %p132, %s133, %s134
    %p138 = pneg %p132
    %p139 = scmp.eq.s32.totalorder %s13, 1
    %p140 = por %p138, %p139
    %p141 = scmp.ne.s32.totalorder %s133, %s136
    %p142 = scmp.eq.s32.totalorder %s13, 0
    %p143 = por %p141, %p142
    %p144 = scmp.ne.s32.totalorder %s133, %s136
    %p145 = scmp.eq.s32.totalorder %s18, 1
    %p146 = por %p144, %p145
    %p147 = scmp.ne.s32.totalorder %s136, %s137
    %p148 = scmp.eq.s32.totalorder %s18, 0
    %p149 = por %p147, %p148
    %p150 = scmp.ne.s32.totalorder %s136, %s137
    %p151 = scmp.eq.s32.totalorder %s19, 1
    %p152 = por %p150, %p151
    %p154 = scmp.ne.s32.totalorder %s137, %s153
    %p155 = scmp.eq.s32.totalorder %s19, 0
    %p156 = por %p154, %p155
    %s157 = ssub.s32 %s13, %s20
    %p158 = scmp.eq.s32.totalorder %s157, 0
    %s160 = sadd.s32 %s159, 1
    %s161 = scalar_select %p158, %s159, %s160
    %p164 = pneg %p158
    %p165 = scmp.eq.s32.totalorder %s13, 1
    %p166 = por %p164, %p165
    %p167 = scmp.ne.s32.totalorder %s159, %s162
    %p168 = scmp.eq.s32.totalorder %s13, 0
    %p169 = por %p167, %p168
    %p170 = scmp.ne.s32.totalorder %s159, %s162
    %p171 = scmp.eq.s32.totalorder %s18, 1
    %p172 = por %p170, %p171
    %p173 = scmp.ne.s32.totalorder %s162, %s163
    %p174 = scmp.eq.s32.totalorder %s18, 0
    %p175 = por %p173, %p174
    %p176 = scmp.ne.s32.totalorder %s162, %s163
    %p177 = scmp.eq.s32.totalorder %s19, 1
    %p178 = por %p176, %p177
    %p180 = scmp.ne.s32.totalorder %s163, %s179
    %p181 = scmp.eq.s32.totalorder %s19, 0
    %p182 = por %p180, %p181
    %p183 = scmp.le.s32.totalorder 1, %s13
    %p184 = scmp.lt.s32.totalorder %s13, 3
    %p185 = pnand %p183, %p184
    %p186 = pneg %p185
    // Predicated region
    $region9: #{_gts_conv_unit_impl.4} parent=5 // pred_check
      _
    $region10: #{_gts_conv_unit_impl.4} parent=5 // pred_check_branch
      %188 = sbr.rel (%p185) target = $region12
    $region11: #{_gts_conv_unit_impl.4} parent=5 // pred_region
      %s189 = ssub.s32 %s13, 1
      // Predicated region
      $region13: #{_gts_conv_unit_impl.4} parent=11 // pred_check
        %p190 = pneg %p60
      $region14: #{_gts_conv_unit_impl.4} parent=11 // pred_check_branch
        %192 = sbr.rel (%p190) target = $region16
      $region15: #{_gts_conv_unit_impl.4} parent=11 // pred_region
        _
      $region16: #{_gts_conv_unit_impl.4} parent=11 // pred_fallthru
        _
      // Predicated region
      $region17: #{_gts_conv_unit_impl.4} parent=11 // pred_check
        %p193 = pneg %p81
      $region18: #{_gts_conv_unit_impl.4} parent=11 // pred_check_branch
        %195 = sbr.rel (%p193) target = $region20
      $region19: #{_gts_conv_unit_impl.4} parent=11 // pred_region
        _
      $region20: #{_gts_conv_unit_impl.4} parent=11 // pred_fallthru
        _
      // Predicated region
      $region21: #{_gts_conv_unit_impl.4} parent=11 // pred_check
        %p196 = pneg %p102
      $region22: #{_gts_conv_unit_impl.4} parent=11 // pred_check_branch
        %198 = sbr.rel (%p196) target = $region24
      $region23: #{_gts_conv_unit_impl.4} parent=11 // pred_region
        _
      $region24: #{_gts_conv_unit_impl.4} parent=11 // pred_fallthru
        _
      // Predicated region
      $region25: #{_gts_conv_unit_impl.4} parent=11 // pred_check
        %p199 = pneg %p123
      $region26: #{_gts_conv_unit_impl.4} parent=11 // pred_check_branch
        %201 = sbr.rel (%p199) target = $region28
      $region27: #{_gts_conv_unit_impl.4} parent=11 // pred_region
        _
      $region28: #{_gts_conv_unit_impl.4} parent=11 // pred_fallthru
        _
    $region12: #{_gts_conv_unit_impl.4} parent=5 // pred_fallthru
      _
    %p202 = scmp.lt.s32.totalorder %s13, 2
    // Predicated region
    $region29: #{_gts_conv_unit_impl.4} parent=5 // pred_check
      %p203 = pneg %p202
    $region30: #{_gts_conv_unit_impl.4} parent=5 // pred_check_branch
      %205 = sbr.rel (%p203) target = $region32
    $region31: #{_gts_conv_unit_impl.4} parent=5 // pred_region
      // Predicated region
      $region33: #{_gts_conv_unit_impl.4} parent=31 // pred_check
        %p206 = pneg %p33
      $region34: #{_gts_conv_unit_impl.4} parent=31 // pred_check_branch
        %208 = sbr.rel (%p206) target = $region36
      $region35: #{_gts_conv_unit_impl.4} parent=31 // pred_region
        %s209 = smul.u32 2, %s13
        %p210 = scmp.lt.s32.totalorder %s209, 3
        %s211 = scalar_select %p210, %s209, 3
        %s212 = smul.addr %s211, 8
        %s213 = scalar_lea.vmem %s0, %s212
        %s214 = smul.u32 2, %s13
      $region36: #{_gts_conv_unit_impl.4} parent=31 // pred_fallthru
        _
    $region32: #{_gts_conv_unit_impl.4} parent=5 // pred_fallthru
      _
    %p215 = scmp.le.s32.totalorder 1, %s13
    %p216 = scmp.lt.s32.totalorder %s13, 3
    %p217 = pnand %p215, %p216
    %p218 = pneg %p217
    // Predicated region
    $region37: #{_gts_conv_unit_impl.4} parent=5 // pred_check
      _
    $region38: #{_gts_conv_unit_impl.4} parent=5 // pred_check_branch
      %220 = sbr.rel (%p217) target = $region40
    $region39: #{_gts_conv_unit_impl.4} parent=5 // pred_region
      %s221 = ssub.s32 %s13, 1
      %s222 = smul.u32 2, %s18
      %p223 = scmp.lt.s32.totalorder %s222, 3
      %s224 = scalar_select %p223, %s222, 3
      %s225 = smul.addr %s224, 8
      %s226 = scalar_lea.vmem %s0, %s225
      %p227 = pneg %p39
      %p228 = pneg %p36
      %p229 = pneg %p60
      %p230 = pneg %p57
      %p231 = pneg %p81
      %p232 = pneg %p78
      %p233 = pneg %p102
      %p234 = pneg %p99
      %p235 = pneg %p123
      %p236 = pneg %p120
      %p237 = pneg %p149
      %p238 = pneg %p146
      %s239 = smul.u32 2, %s18
      %p240 = scmp.lt.s32.totalorder %s239, 3
      %s241 = scalar_select %p240, %s239, 3
      %s242 = smul.addr %s241, 8
      %s243 = scalar_lea.vmem %s5, %s242
      %p244 = pneg %p175
      %p245 = pneg %p172
      %p246 = scmp.lt.s32.totalorder %s18, 1
      %s247 = scalar_select %p246, %s18, 1
      %s248 = smul.addr %s247, 2
      %s249 = scalar_lea.vmem %s6, %s248
      %s250 = smul.u32 2, %s18
      %p251 = scmp.lt.s32.totalorder %s250, 3
      %s252 = scalar_select %p251, %s250, 3
      %s253 = smul.addr %s252, 8
      %s254 = scalar_lea.vmem %s0, %s253
      %s255 = smul.u32 2, %s18
      %s256 = smul.u32 2, %s18
      %p257 = scmp.lt.s32.totalorder %s256, 3
      %s258 = scalar_select %p257, %s256, 3
      %s259 = smul.addr %s258, 8
      %s260 = scalar_lea.vmem %s5, %s259
      %s261 = smul.u32 2, %s18
      %p262 = scmp.lt.s32.totalorder %s18, 1
      %s263 = scalar_select %p262, %s18, 1
      %s264 = smul.addr %s263, 2
      %s265 = scalar_lea.vmem %s6, %s264
      %v266 = vld [vmem:[%s254] sm:$0xff]
      %v267 = vld [vmem:[%s254 + $0x8] sm:$0xff]
      %v268 = vld [vmem:[%s1] sm:$0xff]
      %v269 = vld [vmem:[%s1 + $0x8] sm:$0xff]
      %v270 = vld [vmem:[%s1 + $0x10] sm:$0xff]
      %v271 = vld [vmem:[%s1 + $0x18] sm:$0xff]
      %v272 = vld [vmem:[%s1 + $0x20] sm:$0xff]
      %v273 = vld [vmem:[%s1 + $0x28] sm:$0xff]
      %v274 = vld [vmem:[%s1 + $0x30] sm:$0xff]
      %v275 = vld [vmem:[%s1 + $0x38] sm:$0xff]
      %v276 = vld [vmem:[%s1 + $0x40] sm:$0xff]
      %v277 = vld [vmem:[%s1 + $0x48] sm:$0xff]
      %v278 = vld [vmem:[%s1 + $0x50] sm:$0xff]
      %v279 = vld [vmem:[%s1 + $0x58] sm:$0xff]
      %v280 = vld [vmem:[%s1 + $0x60] sm:$0xff]
      %v281 = vld [vmem:[%s1 + $0x68] sm:$0xff]
      %v282 = vld [vmem:[%s1 + $0x70] sm:$0xff]
      %v283 = vld [vmem:[%s1 + $0x78] sm:$0xff]
      %284 = vmatprep.subr.mxu0 0.0
      %285 = vmatpush1.msra.mxu0 %v268
      %286 = vmatprep.subr.mxu0 0.0
      %287 = vmatpush1.msra.mxu0 %v269
      %288 = vmatprep.subr.mxu0 0.0
      %289 = vmatpush1.msra.mxu0 %v270
      %290 = vmatprep.subr.mxu0 0.0
      %291 = vmatpush1.msra.mxu0 %v271
      %292 = vmatprep.subr.mxu0 0.0
      %293 = vmatpush1.msra.mxu0 %v272
      %294 = vmatprep.subr.mxu0 0.0
      %295 = vmatpush1.msra.mxu0 %v273
      %296 = vmatprep.subr.mxu0 0.0
      %297 = vmatpush1.msra.mxu0 %v274
      %298 = vmatprep.subr.mxu0 0.0
      %299 = vmatpush1.msra.mxu0 %v275
      %300 = vmatprep.subr.mxu0 0.0
      %301 = vmatpush1.msra.mxu0 %v276
      %302 = vmatprep.subr.mxu0 0.0
      %303 = vmatpush1.msra.mxu0 %v277
      %304 = vmatprep.subr.mxu0 0.0
      %305 = vmatpush1.msra.mxu0 %v278
      %306 = vmatprep.subr.mxu0 0.0
      %307 = vmatpush1.msra.mxu0 %v279
      %308 = vmatprep.subr.mxu0 0.0
      %309 = vmatpush1.msra.mxu0 %v280
      %310 = vmatprep.subr.mxu0 0.0
      %311 = vmatpush1.msra.mxu0 %v281
      %312 = vmatprep.subr.mxu0 0.0
      %313 = vmatpush1.msra.mxu0 %v282
      %314 = vmatprep.subr.mxu0 0.0
      %315 = vmatpush1.msra.mxu0 %v283
      %316 = vmatprep.subr.mxu0 0.0
      %317 = vmatpush1.msra.mxu0 0.0
      %318 = vmatprep.subr.mxu0 0.0
      %319 = vmatpush1.msra.mxu0 0.0
      %320 = vmatprep.subr.mxu0 0.0
      %321 = vmatpush1.msra.mxu0 0.0
      %322 = vmatprep.subr.mxu0 0.0
      %323 = vmatpush1.msra.mxu0 0.0
      %324 = vmatprep.subr.mxu0 0.0
      %325 = vmatpush1.msra.mxu0 0.0
      %326 = vmatprep.subr.mxu0 0.0
      %327 = vmatpush1.msra.mxu0 0.0
      %328 = vmatprep.subr.mxu0 0.0
      %329 = vmatpush1.msra.mxu0 0.0
      %330 = vmatprep.subr.mxu0 0.0
      %331 = vmatpush1.msra.mxu0 0.0
      %332 = vmatprep.subr.mxu0 0.0
      %333 = vmatpush1.msra.mxu0 0.0
      %334 = vmatprep.subr.mxu0 0.0
      %335 = vmatpush1.msra.mxu0 0.0
      %336 = vmatprep.subr.mxu0 0.0
      %337 = vmatpush1.msra.mxu0 0.0
      %338 = vmatprep.subr.mxu0 0.0
      %339 = vmatpush1.msra.mxu0 0.0
      %340 = vmatprep.subr.mxu0 0.0
      %341 = vmatpush1.msra.mxu0 0.0
      %342 = vmatprep.subr.mxu0 0.0
      %343 = vmatpush1.msra.mxu0 0.0
      %344 = vmatprep.subr.mxu0 0.0
      %345 = vmatpush1.msra.mxu0 0.0
      %346 = vmatprep.subr.mxu0 0.0
      %347 = vmatpush1.msra.mxu0 0.0
      %348 = vmatprep.mubr.f32.mxu0 0.0
      %349 = vmatmul.mubr.f32.gmra.mrb[0].mxu0 %v266
      %v350 = vpop.f32.mrb[0].mxu0
      %v351 = vadd.f32 0.0, %v350
      %v352 = vpop.f32.mrb[0].mxu0
      %353 = vmatprep.mubr.f32.mxu0 0.0
      %354 = vmatmul.mubr.f32.gmra.mrb[0].mxu0 %v267
      %v355 = vpop.f32.mrb[0].mxu0
      %v356 = vadd.f32 0.0, %v355
      %v357 = vpop.f32.mrb[0].mxu0
      %358 = vdwg.mxu0
      %v359 = vld [vmem:[%s3] sm:$0x1]
      %v361 = vlaneseq
      %v362 = vshrl.u32 %v361, 7
      %v363 = vsub.s32 0, %v362
      %v364 = vrot.slane %v359, %v363
      %v366 = vmul.f32 %v351, %v364
      %v367 = vmul.f32 %v356, %v364
      %v368 = vld [vmem:[%s4] sm:$0x1]
      %v370 = vlaneseq
      %v371 = vshrl.u32 %v370, 7
      %v372 = vsub.s32 0, %v371
      %v373 = vrot.slane %v368, %v372
      %v375 = vadd.f32 %v366, %v373
      %v376 = vadd.f32 %v367, %v373
      %v377 = vmax.f32 %v375, 0.0
      %v378 = vmax.f32 %v376, 0.0
      %v379 = vlaneseq
      %v380 = vand.u32 %v379, 127
      %vm381 = vcmp.lt.s32.totalorder %v380, 0
      %v382 = vsub.s32 0, %v380
      %v383 = vsel %vm381, %v382, %v380
      %v384 = vshrl.u32 %v383, 2
      %v385 = vand.u32 %v383, 3
      %v386 = vsub.s32 0, %v385
      %v387 = vsel %vm381, %v386, %v385
      %vm388 = vcmp.ne.s32.totalorder %v387, 0
      %vm389 = vcmp.lt.s32.totalorder %v387, 0
      %vm390 = vmand %vm389, %vm388
      %v391 = vadd.s32 %v387, 4
      %v392 = vsel %vm390, %v391, %v387
      %vm393 = vcmp.eq.s32.totalorder %v392, 0
      %vm394 = vcmp.eq.s32.totalorder %v392, 1
      %v395 = vlaneseq
      %v396 = vshrl.u32 %v395, 7
      %v397 = vadd.s32 %v396, 8
      %vm398 = vcmp.lt.s32.totalorder %v396, 0
      %v399 = vsub.s32 0, %v396
      %v400 = vsel %vm398, %v399, %v396
      %v401 = vshrl.u32 %v400, 4
      %v402 = vand.u32 %v400, 15
      %v403 = vsub.s32 0, %v402
      %v404 = vsel %vm398, %v403, %v402
      %vm405 = vcmp.lt.s32.totalorder %v397, 0
      %v406 = vsub.s32 0, %v397
      %v407 = vsel %vm405, %v406, %v397
      %v408 = vshrl.u32 %v407, 4
      %v409 = vand.u32 %v407, 15
      %v410 = vsub.s32 0, %v409
      %v411 = vsel %vm405, %v410, %v409
      %vm412 = vcmp.ne.s32.totalorder %v404, 0
      %vm413 = vcmp.ne.s32.totalorder %v411, 0
      %vm414 = vcmp.lt.s32.totalorder %v404, 0
      %vm415 = vcmp.lt.s32.totalorder %v411, 0
      %vm416 = vmand %vm414, %vm412
      %vm417 = vmand %vm415, %vm413
      %v418 = vadd.s32 %v404, 16
      %v419 = vadd.s32 %v411, 16
      %v420 = vsel %vm416, %v418, %v404
      %v421 = vsel %vm417, %v419, %v411
      %vm422 = vcmp.ne.s32.totalorder %v420, 15
      %vm423 = vcmp.ne.s32.totalorder %v421, 15
      %vm424 = vcmp.ne.s32.totalorder %v420, 0
      %vm425 = vcmp.ne.s32.totalorder %v421, 0
      %vm428 = vcmask 1046528
      %v429 = vrot.slane %v377, 1
      %v430 = vrot.slane %v378, 1
      %v431 = vsel %vm428, %v429, %v430
      %v434 = vsel %vm428, %v430, 0.0
      %vm435 = vcmask 1040384
      %v436 = vrot.slane %v377, 7
      %v437 = vrot.slane %v378, 7
      %v438 = vsel %vm435, %v436, %v437
      %v441 = vsel %vm435, 0.0, %v436
      %v442 = vsel %vm422, 1, 0
      %v443 = vsel %vm423, 1, 0
      %vm444 = vcmp.eq.s32.totalorder %v442, 1
      %vm445 = vcmp.eq.s32.totalorder %v443, 1
      %v446 = vsel %vm444, %v431, 0.0
      %v447 = vsel %vm445, %v434, 0.0
      %v448 = vsel %vm424, 1, 0
      %v449 = vsel %vm425, 1, 0
      %vm450 = vcmp.eq.s32.totalorder %v448, 1
      %vm451 = vcmp.eq.s32.totalorder %v449, 1
      %v452 = vsel %vm450, %v441, 0.0
      %v453 = vsel %vm451, %v438, 0.0
      %v454 = vsel %vm394, 1, 0
      %vm455 = vcmp.eq.s32.totalorder %v454, 1
      %v456 = vsel %vm455, %v452, %v377
      %v457 = vsel %vm455, %v453, %v378
      %v458 = vsel %vm393, 1, 0
      %vm459 = vcmp.eq.s32.totalorder %v458, 1
      %v460 = vsel %vm459, %v446, %v456
      %v461 = vsel %vm459, %v447, %v457
      %v462 = vld [vmem:[%s2] sm:$0xff]
      %v463 = vld [vmem:[%s2 + $0x8] sm:$0xff]
      %v464 = vld [vmem:[%s2 + $0x10] sm:$0xff]
      %v465 = vld [vmem:[%s2 + $0x18] sm:$0xff]
      %v466 = vld [vmem:[%s2 + $0x20] sm:$0xff]
      %v467 = vld [vmem:[%s2 + $0x28] sm:$0xff]
      %v468 = vld [vmem:[%s2 + $0x30] sm:$0xff]
      %v469 = vld [vmem:[%s2 + $0x38] sm:$0xff]
      %v470 = vld [vmem:[%s2 + $0x40] sm:$0xff]
      %v471 = vld [vmem:[%s2 + $0x48] sm:$0xff]
      %v472 = vld [vmem:[%s2 + $0x50] sm:$0xff]
      %v473 = vld [vmem:[%s2 + $0x58] sm:$0xff]
      %v474 = vld [vmem:[%s2 + $0x60] sm:$0xff]
      %v475 = vld [vmem:[%s2 + $0x68] sm:$0xff]
      %v476 = vld [vmem:[%s2 + $0x70] sm:$0xff]
      %v477 = vld [vmem:[%s2 + $0x78] sm:$0xff]
      %478 = vmatprep.subr.mxu0 0.0
      %479 = vmatpush1.msra.mxu0 %v462
      %480 = vmatprep.subr.mxu0 0.0
      %481 = vmatpush1.msra.mxu0 %v463
      %482 = vmatprep.subr.mxu0 0.0
      %483 = vmatpush1.msra.mxu0 %v464
      %484 = vmatprep.subr.mxu0 0.0
      %485 = vmatpush1.msra.mxu0 %v465
      %486 = vmatprep.subr.mxu0 0.0
      %487 = vmatpush1.msra.mxu0 %v466
      %488 = vmatprep.subr.mxu0 0.0
      %489 = vmatpush1.msra.mxu0 %v467
      %490 = vmatprep.subr.mxu0 0.0
      %491 = vmatpush1.msra.mxu0 %v468
      %492 = vmatprep.subr.mxu0 0.0
      %493 = vmatpush1.msra.mxu0 %v469
      %494 = vmatprep.subr.mxu0 0.0
      %495 = vmatpush1.msra.mxu0 %v470
      %496 = vmatprep.subr.mxu0 0.0
      %497 = vmatpush1.msra.mxu0 %v471
      %498 = vmatprep.subr.mxu0 0.0
      %499 = vmatpush1.msra.mxu0 %v472
      %500 = vmatprep.subr.mxu0 0.0
      %501 = vmatpush1.msra.mxu0 %v473
      %502 = vmatprep.subr.mxu0 0.0
      %503 = vmatpush1.msra.mxu0 %v474
      %504 = vmatprep.subr.mxu0 0.0
      %505 = vmatpush1.msra.mxu0 %v475
      %506 = vmatprep.subr.mxu0 0.0
      %507 = vmatpush1.msra.mxu0 %v476
      %508 = vmatprep.subr.mxu0 0.0
      %509 = vmatpush1.msra.mxu0 %v477
      %510 = vmatprep.subr.mxu0 0.0
      %511 = vmatpush1.msra.mxu0 0.0
      %512 = vmatprep.subr.mxu0 0.0
      %513 = vmatpush1.msra.mxu0 0.0
      %514 = vmatprep.subr.mxu0 0.0
      %515 = vmatpush1.msra.mxu0 0.0
      %516 = vmatprep.subr.mxu0 0.0
      %517 = vmatpush1.msra.mxu0 0.0
      %518 = vmatprep.subr.mxu0 0.0
      %519 = vmatpush1.msra.mxu0 0.0
      %520 = vmatprep.subr.mxu0 0.0
      %521 = vmatpush1.msra.mxu0 0.0
      %522 = vmatprep.subr.mxu0 0.0
      %523 = vmatpush1.msra.mxu0 0.0
      %524 = vmatprep.subr.mxu0 0.0
      %525 = vmatpush1.msra.mxu0 0.0
      %526 = vmatprep.subr.mxu0 0.0
      %527 = vmatpush1.msra.mxu0 0.0
      %528 = vmatprep.subr.mxu0 0.0
      %529 = vmatpush1.msra.mxu0 0.0
      %530 = vmatprep.subr.mxu0 0.0
      %531 = vmatpush1.msra.mxu0 0.0
      %532 = vmatprep.subr.mxu0 0.0
      %533 = vmatpush1.msra.mxu0 0.0
      %534 = vmatprep.subr.mxu0 0.0
      %535 = vmatpush1.msra.mxu0 0.0
      %536 = vmatprep.subr.mxu0 0.0
      %537 = vmatpush1.msra.mxu0 0.0
      %538 = vmatprep.subr.mxu0 0.0
      %539 = vmatpush1.msra.mxu0 0.0
      %540 = vmatprep.subr.mxu0 0.0
      %541 = vmatpush1.msra.mxu0 0.0
      %542 = vmatprep.mubr.f32.mxu0 0.0
      %543 = vmatmul.mubr.f32.gmra.mrb[0].mxu0 %v460
      %v544 = vpop.f32.mrb[0].mxu0
      %v545 = vadd.f32 0.0, %v544
      %v546 = vpop.f32.mrb[0].mxu0
      %547 = vmatprep.mubr.f32.mxu0 0.0
      %548 = vmatmul.mubr.f32.gmra.mrb[0].mxu0 %v461
      %v549 = vpop.f32.mrb[0].mxu0
      %v550 = vadd.f32 0.0, %v549
      %v551 = vpop.f32.mrb[0].mxu0
      %552 = vdwg.mxu0
      %553 = vst [vmem:[%s260] sm:$0xff] %v545
      %554 = vst [vmem:[%s260 + $0x8] sm:$0xff] %v550
      %v555 = vadd.f32 %v545, %v550
      %v556 = vrot.slane %v555, 4
      %v557 = vadd.f32 %v555, %v556
      %v558 = vrot.slane %v557, 2
      %v559 = vadd.f32 %v557, %v558
      %v560 = vrot.slane %v559, 1
      %v561 = vadd.f32 %v559, %v560
      %v562 = vmul.f32 %v545, %v545
      %v563 = vmul.f32 %v550, %v550
      %v564 = vadd.f32 %v562, %v563
      %v565 = vrot.slane %v564, 4
      %v566 = vadd.f32 %v564, %v565
      %v567 = vrot.slane %v566, 2
      %v568 = vadd.f32 %v566, %v567
      %v569 = vrot.slane %v568, 1
      %v570 = vadd.f32 %v568, %v569
      %v571 = vsel %vm435, %v561, %v570
      %572 = vst [vmem:[%s265] sm:$0x3] %v571
      %s573 = smul.u32 2, %s18
      %p574 = scmp.lt.s32.totalorder %s573, 3
      %s575 = scalar_select %p574, %s573, 3
      %s576 = smul.addr %s575, 8
      %s577 = scalar_lea.vmem %s5, %s576
      %p578 = scmp.lt.s32.totalorder %s18, 1
      %s579 = scalar_select %p578, %s18, 1
      %s580 = smul.addr %s579, 2
      %s581 = scalar_lea.vmem %s6, %s580
      // Predicated region
      $region41: #{_gts_conv_unit_impl.4} parent=39 // pred_check
        %p582 = pneg %p146
      $region42: #{_gts_conv_unit_impl.4} parent=39 // pred_check_branch
        %584 = sbr.rel (%p582) target = $region44
      $region43: #{_gts_conv_unit_impl.4} parent=39 // pred_region
        %s585 = smul.u32 2, %s18
      $region44: #{_gts_conv_unit_impl.4} parent=39 // pred_fallthru
        _
      // Predicated region
      $region45: #{_gts_conv_unit_impl.4} parent=39 // pred_check
        %p586 = pneg %p172
      $region46: #{_gts_conv_unit_impl.4} parent=39 // pred_check_branch
        %588 = sbr.rel (%p586) target = $region48
      $region47: #{_gts_conv_unit_impl.4} parent=39 // pred_region
        _
      $region48: #{_gts_conv_unit_impl.4} parent=39 // pred_fallthru
        _
    $region40: #{_gts_conv_unit_impl.4} parent=5 // pred_fallthru
      _
    %p589 = scmp.le.s32.totalorder 2, %s13
    // Predicated region
    $region49: #{_gts_conv_unit_impl.4} parent=5 // pred_check
      %p590 = pneg %p589
    $region50: #{_gts_conv_unit_impl.4} parent=5 // pred_check_branch
      %592 = sbr.rel (%p590) target = $region52
    $region51: #{_gts_conv_unit_impl.4} parent=5 // pred_region
      %s593 = ssub.s32 %s13, 2
      // Predicated region
      $region53: #{_gts_conv_unit_impl.4} parent=51 // pred_check
        %p594 = pneg %p152
      $region54: #{_gts_conv_unit_impl.4} parent=51 // pred_check_branch
        %596 = sbr.rel (%p594) target = $region56
      $region55: #{_gts_conv_unit_impl.4} parent=51 // pred_region
        %s597 = smul.u32 2, %s19
        %p598 = scmp.lt.s32.totalorder %s597, 3
        %s599 = scalar_select %p598, %s597, 3
        %s600 = smul.addr %s599, 8
        %s601 = scalar_lea.vmem %s5, %s600
      $region56: #{_gts_conv_unit_impl.4} parent=51 // pred_fallthru
        _
      // Predicated region
      $region57: #{_gts_conv_unit_impl.4} parent=51 // pred_check
        %p602 = pneg %p178
      $region58: #{_gts_conv_unit_impl.4} parent=51 // pred_check_branch
        %604 = sbr.rel (%p602) target = $region60
      $region59: #{_gts_conv_unit_impl.4} parent=51 // pred_region
        %p605 = scmp.lt.s32.totalorder %s19, 1
        %s606 = scalar_select %p605, %s19, 1
        %s607 = smul.addr %s606, 2
        %s608 = scalar_lea.vmem %s6, %s607
      $region60: #{_gts_conv_unit_impl.4} parent=51 // pred_fallthru
        _
    $region52: #{_gts_conv_unit_impl.4} parent=5 // pred_fallthru
      _
  $region6: #{_gts_conv_unit_impl.4} parent=0 // loop_footer
    %s17 = sadd.s32 1, %s13
  $region7: #{_gts_conv_unit_impl.4} parent=0 // loop_footer_branch
    %12 = sbr.rel target = $region3
  $region8: #{_gts_conv_unit_impl.4} parent=0 // loop_exit
    _

</llo_original>
